<compile_context>
chip_gen: v6e
topology: v6e:2x2x1
jax: 0.10.0
libtpu: 0.0.40
codegen_flags: <defaults>
</compile_context>

<pallas_src>
import functools

import jax
import jax.numpy as jnp
from jax.experimental import pallas as pl
from jax.experimental.pallas import tpu as pltpu

_LANE = 128
_SUBLANE = 8


def _round_up(v, m):
    return ((v + m - 1) // m) * m


@functools.lru_cache(maxsize=1)
def _vmem_capacity_bytes():
    """Physical VMEM per TensorCore; conservative 64 MiB (v7x) fallback."""
    try:
        info = pltpu.get_tpu_info()
        cap = int(getattr(info, "vmem_capacity_bytes", 0))
        if cap > 0:
            return cap
    except Exception:
        pass
    return 64 * 1024 * 1024


# ----------------------------------------------------------------------------
# Kernels (fully fused MLP on one batch tile; weights are VMEM-resident)
# ----------------------------------------------------------------------------
def _mlp3_kernel(x_ref, w1_ref, b1_ref, w2_ref, b2_ref, w3_ref, b3_ref, o_ref):
    h = jnp.dot(x_ref[...], w1_ref[...], preferred_element_type=jnp.float32)
    h = jnp.maximum(h + b1_ref[...], 0.0)
    h = jnp.dot(h, w2_ref[...], preferred_element_type=jnp.float32)
    h = jnp.maximum(h + b2_ref[...], 0.0)
    h = jnp.dot(h, w3_ref[...], preferred_element_type=jnp.float32)
    o_ref[...] = (h + b3_ref[...]).astype(o_ref.dtype)


def _mlp2_kernel(x_ref, w1_ref, b1_ref, w2_ref, b2_ref, o_ref):
    h = jnp.dot(x_ref[...], w1_ref[...], preferred_element_type=jnp.float32)
    h = jnp.maximum(h + b1_ref[...], 0.0)
    h = jnp.dot(h, w2_ref[...], preferred_element_type=jnp.float32)
    o_ref[...] = (h + b2_ref[...]).astype(o_ref.dtype)


# ----------------------------------------------------------------------------
# One-time parameter preparation (OUTSIDE the jitted forward)
# ----------------------------------------------------------------------------
def prepare_params(params, layer_num, dtype=jnp.float32, pad_output=True):
    """Transpose PyTorch-convention weights (out, in) -> (in, out), zero-pad
    hidden (and, by default, output) feature dims to multiples of 128
    (lane-dense; padded units stay exactly 0 through bias-add and ReLU), and
    reshape biases to (1, out_padded).  Returns (prepped_tuple, out_features)."""
    # TODO(synk): on v6e/v7x, padding hidden dims to 256 (full MXU tile) can
    # help once a big-hidden config becomes MXU-bound; skipped here (DMA-bound).
    # TODO(synk): for tiny out_features (<=32) with large batch, benchmark
    # pad_output=False (unpadded masked stores, 8x less HBM write traffic)
    # against the default lane-dense padded output.

    def prep_layer(w, b, in_dim_padded, pad_out):
        out_dim = w.shape[0]
        out_p = _round_up(out_dim, _LANE) if pad_out else out_dim
        wt = jnp.asarray(w, dtype).T                      # (in, out)
        wt = jnp.pad(wt, ((0, in_dim_padded - wt.shape[0]),
                          (0, out_p - out_dim)))
        bp = jnp.pad(jnp.asarray(b, dtype), (0, out_p - out_dim)).reshape(1, out_p)
        return wt, bp, out_p

    inputn = params["fc1_W"].shape[1]
    w1, b1, n1p = prep_layer(params["fc1_W"], params["fc1_bias"], inputn, True)
    if layer_num > 2:
        w2, b2, n2p = prep_layer(params["fc2_W"], params["fc2_bias"], n1p, True)
        w3, b3, _ = prep_layer(params["fc3_W"], params["fc3_bias"], n2p, pad_output)
        return (w1, b1, w2, b2, w3, b3), params["fc3_W"].shape[0]
    w2, b2, _ = prep_layer(params["fc2_W"], params["fc2_bias"], n1p, pad_output)
    return (w1, b1, w2, b2), params["fc2_W"].shape[0]


# ----------------------------------------------------------------------------
# Batch-tile selection (static, trace-time)
# ----------------------------------------------------------------------------
def _choose_batch_tile(B, tb_cap):
    """Pick a batch tile (multiple of 8) that (a) fits the VMEM-derived cap
    (<=1024), (b) gives >= 4 grid steps when the batch allows it (>= 2 steps
    per TensorCore on v7x, better pipelining everywhere), and (c) divides the
    8-aligned batch when possible so no padding / post-call row slice is
    needed."""
    bp8 = _round_up(max(B, 1), _SUBLANE)
    tb_cap = max(_SUBLANE, (min(tb_cap, 1024) // _SUBLANE) * _SUBLANE)
    target_steps = 4
    tb = max(_SUBLANE, min(tb_cap, (bp8 // target_steps) // _SUBLANE * _SUBLANE))
    if bp8 % tb != 0:
        units, d = bp8 // _SUBLANE, tb // _SUBLANE
        while d > 1 and units % d != 0:
            d -= 1
        tb = d * _SUBLANE
    return tb


def _full_block_spec(a, single_buffer):
    """Grid-invariant (weight/bias) block: whole array at block index (0, 0).
    single_buffer=True asks the pipeliner to keep a single VMEM copy (the block
    never changes across grid steps)."""
    if single_buffer:
        try:
            return pl.BlockSpec(a.shape, lambda i: (0, 0),
                                pipeline_mode=pl.Buffered(1))
        except (TypeError, AttributeError):
            pass
    return pl.BlockSpec(a.shape, lambda i: (0, 0))


# ----------------------------------------------------------------------------
# Jitted forward
# ----------------------------------------------------------------------------
@functools.partial(jax.jit, static_argnames=("layer_num", "out_features",
                                             "batch_tile", "single_buffer_weights"))
def _simple_nn_forward_impl(x, prepped, layer_num, out_features,
                            batch_tile, single_buffer_weights):
    B, inputn = x.shape
    itemsize = jnp.dtype(x.dtype).itemsize
    n_out_p = prepped[-1].shape[1]
    weight_bytes = sum(int(a.size) * jnp.dtype(a.dtype).itemsize for a in prepped)

    cap = _vmem_capacity_bytes()
    budget = cap - max(4 << 20, cap // 8)           # headroom for Mosaic scratch
    w_cost = weight_bytes if single_buffer_weights else 2 * weight_bytes

    if batch_tile is None:
        io_row = (inputn + n_out_p) * itemsize      # x row + out row, double-buffered
        avail = budget - w_cost - (2 << 20)
        tb_cap = max(_SUBLANE, int(avail) // (2 * io_row)) if avail > 0 else _SUBLANE
        tb = _choose_batch_tile(B, tb_cap)
    else:
        tb = batch_tile
    assert tb % _SUBLANE == 0, "batch_tile must be a multiple of 8 (f32 sublane)"

    Bp = _round_up(B, tb)
    if Bp != B:
        x = jnp.pad(x, ((0, Bp - B), (0, 0)))
    grid = (Bp // tb,)

    x_spec = pl.BlockSpec((tb, inputn), lambda i: (i, 0))
    out_spec = pl.BlockSpec((tb, n_out_p), lambda i: (i, 0))
    in_specs = [x_spec] + [_full_block_spec(a, single_buffer_weights)
                           for a in prepped]

    kernel = _mlp3_kernel if layer_num > 2 else _mlp2_kernel

    # VMEM budget: weights counted once (single-buffered) + double-buffered
    # x/out tiles + slack; ceiling is the detected chip's capacity - headroom.
    # TODO(synk): when weight_bytes exceeds the VMEM budget (notably v7x's
    # 64 MiB/TC), add a K/N-tiling grid axis with an f32 VMEM accumulator (or
    # per-layer pallas_calls) instead of full-weight blocks.
    needed = w_cost + 2 * tb * (inputn + n_out_p) * itemsize + (4 << 20)
    vmem_limit = int(min(cap, max(32 << 20, min(needed, budget))))

    dims = [inputn] + [w.shape[1] for w in prepped[0::2]]
    flops = sum(2 * Bp * din * dout for din, dout in zip(dims[:-1], dims[1:]))
    bytes_accessed = int((Bp * inputn + Bp * n_out_p) * itemsize + weight_bytes)

    out = pl.pallas_call(
        kernel,
        out_shape=jax.ShapeDtypeStruct((Bp, n_out_p), x.dtype),
        grid=grid,
        in_specs=in_specs,
        out_specs=out_spec,
        compiler_params=pltpu.CompilerParams(
            dimension_semantics=("parallel",),
            vmem_limit_bytes=vmem_limit),
        cost_estimate=pl.CostEstimate(flops=flops, transcendentals=0,
                                      bytes_accessed=bytes_accessed),
    )(x, *prepped)

    # Only pay for a slice (separate HBM read+write) if padding actually occurred.
    if Bp != B or n_out_p != out_features:
        out = out[:B, :out_features]
    return out


_WEIGHT_SINGLE_BUFFER = True


def simple_nn_forward(x, prepped, layer_num, out_features, batch_tile=None):
    """Public wrapper: tries single-buffered weight blocks first; falls back to
    default double-buffering if this jax build rejects pl.Buffered(1)."""
    global _WEIGHT_SINGLE_BUFFER
    if _WEIGHT_SINGLE_BUFFER:
        try:
            return _simple_nn_forward_impl(x, prepped, layer_num, out_features,
                                           batch_tile, True)
        except Exception:
            _WEIGHT_SINGLE_BUFFER = False
    return _simple_nn_forward_impl(x, prepped, layer_num, out_features,
                                   batch_tile, False)


# ----------------------------------------------------------------------------
# Pure-JAX reference (matches the PyTorch forward exactly)
# ----------------------------------------------------------------------------
def _reference_forward(x, params, layer_num):
    h = x @ params["fc1_W"].T + params["fc1_bias"]
    h = jnp.maximum(h, 0.0)
    h = h @ params["fc2_W"].T + params["fc2_bias"]
    if layer_num > 2:
        h = jnp.maximum(h, 0.0)
        h = h @ params["fc3_W"].T + params["fc3_bias"]
    return h


if __name__ == "__main__":
    # Small shapes consistent with the module (feature dims intentionally
    # sub-128 to exercise the padding path): 3-layer and 2-layer cases.
    batch, inputn, n1, n2, n3 = 128, 32, 64, 64, 16

    key = jax.random.PRNGKey(0)
    kx, k1, k2, k3, kb1, kb2, kb3 = jax.random.split(key, 7)
    params = {
        "fc1_W": jax.random.normal(k1, (n1, inputn), jnp.float32) * 0.1,
        "fc1_bias": jax.random.normal(kb1, (n1,), jnp.float32) * 0.1,
        "fc2_W": jax.random.normal(k2, (n2, n1), jnp.float32) * 0.1,
        "fc2_bias": jax.random.normal(kb2, (n2,), jnp.float32) * 0.1,
        "fc3_W": jax.random.normal(k3, (n3, n2), jnp.float32) * 0.1,
        "fc3_bias": jax.random.normal(kb3, (n3,), jnp.float32) * 0.1,
    }
    x = jax.random.normal(kx, (batch, inputn), jnp.float32)

    # 3-layer: automatic tile selection -> tb=32, grid=(4,) (>=2 steps/TC on v7x).
    prepped3, nout3 = prepare_params(params, layer_num=3)
    out3 = jax.block_until_ready(
        simple_nn_forward(x, prepped3, layer_num=3, out_features=nout3))
    ref3 = _reference_forward(x, params, layer_num=3)
    assert out3.shape == (batch, n3), out3.shape
    assert jnp.allclose(out3, ref3, atol=1e-4, rtol=1e-4), "3-layer mismatch"

    # 2-layer: explicit batch_tile=64 -> grid=(2,).
    prepped2, nout2 = prepare_params(params, layer_num=2)
    out2 = jax.block_until_ready(
        simple_nn_forward(x, prepped2, layer_num=2, out_features=nout2,
                          batch_tile=64))
    ref2 = _reference_forward(x, params, layer_num=2)
    assert out2.shape == (batch, n2), out2.shape
    assert jnp.allclose(out2, ref2, atol=1e-4, rtol=1e-4), "2-layer mismatch"

    print("KERNEL_OK")
</pallas_src>

<mosaic_0001>
module attributes {stable_mosaic.version = 11 : i64} {
  func.func @_mlp3_kernel(%arg0: i32, %arg1: memref<32x32xf32, #tpu.memory_space<vmem>>, %arg2: memref<32x128xf32, #tpu.memory_space<vmem>>, %arg3: memref<1x128xf32, #tpu.memory_space<vmem>>, %arg4: memref<128x128xf32, #tpu.memory_space<vmem>>, %arg5: memref<1x128xf32, #tpu.memory_space<vmem>>, %arg6: memref<128x128xf32, #tpu.memory_space<vmem>>, %arg7: memref<1x128xf32, #tpu.memory_space<vmem>>, %arg8: memref<32x128xf32, #tpu.memory_space<vmem>>) attributes {dimension_semantics = [#tpu.dimension_semantics<parallel>], iteration_bounds = array<i64: 4>, scalar_prefetch = 0 : i64, scratch_operands = 0 : i64, tpu.core_type = #tpu.core_type<tc>, window_params = [{transform_indices = @transform_0, window_bounds = array<i64: 32, 32>}, {pipeline_mode = #tpu.pipeline_mode<synchronous>, transform_indices = @transform_1, window_bounds = array<i64: 32, 128>}, {pipeline_mode = #tpu.pipeline_mode<synchronous>, transform_indices = @transform_2, window_bounds = array<i64: 1, 128>}, {pipeline_mode = #tpu.pipeline_mode<synchronous>, transform_indices = @transform_3, window_bounds = array<i64: 128, 128>}, {pipeline_mode = #tpu.pipeline_mode<synchronous>, transform_indices = @transform_4, window_bounds = array<i64: 1, 128>}, {pipeline_mode = #tpu.pipeline_mode<synchronous>, transform_indices = @transform_5, window_bounds = array<i64: 128, 128>}, {pipeline_mode = #tpu.pipeline_mode<synchronous>, transform_indices = @transform_6, window_bounds = array<i64: 1, 128>}, {transform_indices = @transform_7, window_bounds = array<i64: 32, 128>}]} {
    %c0 = arith.constant 0 : index
    %c0_0 = arith.constant 0 : index
    %0 = vector.load %arg1[%c0, %c0_0] : memref<32x32xf32, #tpu.memory_space<vmem>>, vector<32x32xf32>
    %c0_1 = arith.constant 0 : index
    %c0_2 = arith.constant 0 : index
    %1 = vector.load %arg2[%c0_1, %c0_2] : memref<32x128xf32, #tpu.memory_space<vmem>>, vector<32x128xf32>
    %cst = arith.constant dense<0.000000e+00> : vector<32x128xf32>
    %2 = tpu.matmul %0, %1, %cst {dimension_numbers = #tpu.dot_dimension_numbers<[1], [0], [0], [1], [0, 0, 1, 1], [], []>} : vector<32x32xf32>, vector<32x128xf32>, vector<32x128xf32> -> vector<32x128xf32>
    %c0_3 = arith.constant 0 : index
    %c0_4 = arith.constant 0 : index
    %3 = vector.load %arg3[%c0_3, %c0_4] : memref<1x128xf32, #tpu.memory_space<vmem>>, vector<1x128xf32>
    %4 = vector.broadcast %3 : vector<1x128xf32> to vector<32x128xf32>
    %5 = arith.addf %2, %4 : vector<32x128xf32>
    %cst_5 = arith.constant 0.000000e+00 : f32
    %6 = vector.broadcast %cst_5 : f32 to vector<32x128xf32>
    %7 = arith.maximumf %5, %6 : vector<32x128xf32>
    %c0_6 = arith.constant 0 : index
    %c0_7 = arith.constant 0 : index
    %8 = vector.load %arg4[%c0_6, %c0_7] : memref<128x128xf32, #tpu.memory_space<vmem>>, vector<128x128xf32>
    %cst_8 = arith.constant dense<0.000000e+00> : vector<32x128xf32>
    %9 = tpu.matmul %7, %8, %cst_8 {dimension_numbers = #tpu.dot_dimension_numbers<[1], [0], [0], [1], [0, 0, 1, 1], [], []>} : vector<32x128xf32>, vector<128x128xf32>, vector<32x128xf32> -> vector<32x128xf32>
    %c0_9 = arith.constant 0 : index
    %c0_10 = arith.constant 0 : index
    %10 = vector.load %arg5[%c0_9, %c0_10] : memref<1x128xf32, #tpu.memory_space<vmem>>, vector<1x128xf32>
    %11 = vector.broadcast %10 : vector<1x128xf32> to vector<32x128xf32>
    %12 = arith.addf %9, %11 : vector<32x128xf32>
    %cst_11 = arith.constant 0.000000e+00 : f32
    %13 = vector.broadcast %cst_11 : f32 to vector<32x128xf32>
    %14 = arith.maximumf %12, %13 : vector<32x128xf32>
    %c0_12 = arith.constant 0 : index
    %c0_13 = arith.constant 0 : index
    %15 = vector.load %arg6[%c0_12, %c0_13] : memref<128x128xf32, #tpu.memory_space<vmem>>, vector<128x128xf32>
    %cst_14 = arith.constant dense<0.000000e+00> : vector<32x128xf32>
    %16 = tpu.matmul %14, %15, %cst_14 {dimension_numbers = #tpu.dot_dimension_numbers<[1], [0], [0], [1], [0, 0, 1, 1], [], []>} : vector<32x128xf32>, vector<128x128xf32>, vector<32x128xf32> -> vector<32x128xf32>
    %c0_15 = arith.constant 0 : index
    %c0_16 = arith.constant 0 : index
    %17 = vector.load %arg7[%c0_15, %c0_16] : memref<1x128xf32, #tpu.memory_space<vmem>>, vector<1x128xf32>
    %18 = vector.broadcast %17 : vector<1x128xf32> to vector<32x128xf32>
    %19 = arith.addf %16, %18 : vector<32x128xf32>
    %c0_17 = arith.constant 0 : index
    %c0_18 = arith.constant 0 : index
    %20 = vector.load %arg8[%c0_17, %c0_18] : memref<32x128xf32, #tpu.memory_space<vmem>>, vector<32x128xf32>
    tpu.vector_store %arg8[%c0_17, %c0_18], %19 {strides = array<i32>} : memref<32x128xf32, #tpu.memory_space<vmem>>, vector<32x128xf32>,
    return
  }
  func.func @transform_0(%arg0: i32) -> (i32, i32) {
    %c0_i32 = arith.constant 0 : i32
    %c0_i32_0 = arith.constant 0 : i32
    return %arg0, %c0_i32 : i32, i32
  }
  func.func @transform_1(%arg0: i32) -> (i32, i32) {
    %c0_i32 = arith.constant 0 : i32
    %c0_i32_0 = arith.constant 0 : i32
    %c0_i32_1 = arith.constant 0 : i32
    return %c0_i32, %c0_i32_0 : i32, i32
  }
  func.func @transform_2(%arg0: i32) -> (i32, i32) {
    %c0_i32 = arith.constant 0 : i32
    %c0_i32_0 = arith.constant 0 : i32
    %c0_i32_1 = arith.constant 0 : i32
    return %c0_i32, %c0_i32_0 : i32, i32
  }
  func.func @transform_3(%arg0: i32) -> (i32, i32) {
    %c0_i32 = arith.constant 0 : i32
    %c0_i32_0 = arith.constant 0 : i32
    %c0_i32_1 = arith.constant 0 : i32
    return %c0_i32, %c0_i32_0 : i32, i32
  }
  func.func @transform_4(%arg0: i32) -> (i32, i32) {
    %c0_i32 = arith.constant 0 : i32
    %c0_i32_0 = arith.constant 0 : i32
    %c0_i32_1 = arith.constant 0 : i32
    return %c0_i32, %c0_i32_0 : i32, i32
  }
  func.func @transform_5(%arg0: i32) -> (i32, i32) {
    %c0_i32 = arith.constant 0 : i32
    %c0_i32_0 = arith.constant 0 : i32
    %c0_i32_1 = arith.constant 0 : i32
    return %c0_i32, %c0_i32_0 : i32, i32
  }
  func.func @transform_6(%arg0: i32) -> (i32, i32) {
    %c0_i32 = arith.constant 0 : i32
    %c0_i32_0 = arith.constant 0 : i32
    %c0_i32_1 = arith.constant 0 : i32
    return %c0_i32, %c0_i32_0 : i32, i32
  }
  func.func @transform_7(%arg0: i32) -> (i32, i32) {
    %c0_i32 = arith.constant 0 : i32
    %c0_i32_0 = arith.constant 0 : i32
    return %arg0, %c0_i32 : i32, i32
  }
}

module attributes {stable_mosaic.version = 11 : i64} {
  func.func @_mlp3_kernel(%arg0: i32, %arg1: memref<32x32xf32, #tpu.memory_space<vmem>>, %arg2: memref<32x128xf32, #tpu.memory_space<vmem>>, %arg3: memref<1x128xf32, #tpu.memory_space<vmem>>, %arg4: memref<128x128xf32, #tpu.memory_space<vmem>>, %arg5: memref<1x128xf32, #tpu.memory_space<vmem>>, %arg6: memref<128x128xf32, #tpu.memory_space<vmem>>, %arg7: memref<1x128xf32, #tpu.memory_space<vmem>>, %arg8: memref<32x128xf32, #tpu.memory_space<vmem>>) attributes {dimension_semantics = [#tpu.dimension_semantics<parallel>], iteration_bounds = array<i64: 4>, scalar_prefetch = 0 : i64, scratch_operands = 0 : i64, tpu.core_type = #tpu.core_type<tc>, window_params = [{transform_indices = @transform_0, window_bounds = array<i64: 32, 32>}, {pipeline_mode = #tpu.pipeline_mode<synchronous>, transform_indices = @transform_1, window_bounds = array<i64: 32, 128>}, {pipeline_mode = #tpu.pipeline_mode<synchronous>, transform_indices = @transform_2, window_bounds = array<i64: 1, 128>}, {pipeline_mode = #tpu.pipeline_mode<synchronous>, transform_indices = @transform_3, window_bounds = array<i64: 128, 128>}, {pipeline_mode = #tpu.pipeline_mode<synchronous>, transform_indices = @transform_4, window_bounds = array<i64: 1, 128>}, {pipeline_mode = #tpu.pipeline_mode<synchronous>, transform_indices = @transform_5, window_bounds = array<i64: 128, 128>}, {pipeline_mode = #tpu.pipeline_mode<synchronous>, transform_indices = @transform_6, window_bounds = array<i64: 1, 128>}, {transform_indices = @transform_7, window_bounds = array<i64: 32, 128>}]} {
    %c0 = arith.constant 0 : index
    %c0_0 = arith.constant 0 : index
    %0 = vector.load %arg1[%c0, %c0_0] : memref<32x32xf32, #tpu.memory_space<vmem>>, vector<32x32xf32>
    %c0_1 = arith.constant 0 : index
    %c0_2 = arith.constant 0 : index
    %1 = vector.load %arg2[%c0_1, %c0_2] : memref<32x128xf32, #tpu.memory_space<vmem>>, vector<32x128xf32>
    %cst = arith.constant dense<0.000000e+00> : vector<32x128xf32>
    %2 = tpu.matmul %0, %1, %cst {dimension_numbers = #tpu.dot_dimension_numbers<[1], [0], [0], [1], [0, 0, 1, 1], [], []>} : vector<32x32xf32>, vector<32x128xf32>, vector<32x128xf32> -> vector<32x128xf32>
    %c0_3 = arith.constant 0 : index
    %c0_4 = arith.constant 0 : index
    %3 = vector.load %arg3[%c0_3, %c0_4] : memref<1x128xf32, #tpu.memory_space<vmem>>, vector<1x128xf32>
    %4 = vector.broadcast %3 : vector<1x128xf32> to vector<32x128xf32>
    %5 = arith.addf %2, %4 : vector<32x128xf32>
    %cst_5 = arith.constant 0.000000e+00 : f32
    %6 = vector.broadcast %cst_5 : f32 to vector<32x128xf32>
    %7 = arith.maximumf %5, %6 : vector<32x128xf32>
    %c0_6 = arith.constant 0 : index
    %c0_7 = arith.constant 0 : index
    %8 = vector.load %arg4[%c0_6, %c0_7] : memref<128x128xf32, #tpu.memory_space<vmem>>, vector<128x128xf32>
    %cst_8 = arith.constant dense<0.000000e+00> : vector<32x128xf32>
    %9 = tpu.matmul %7, %8, %cst_8 {dimension_numbers = #tpu.dot_dimension_numbers<[1], [0], [0], [1], [0, 0, 1, 1], [], []>} : vector<32x128xf32>, vector<128x128xf32>, vector<32x128xf32> -> vector<32x128xf32>
    %c0_9 = arith.constant 0 : index
    %c0_10 = arith.constant 0 : index
    %10 = vector.load %arg5[%c0_9, %c0_10] : memref<1x128xf32, #tpu.memory_space<vmem>>, vector<1x128xf32>
    %11 = vector.broadcast %10 : vector<1x128xf32> to vector<32x128xf32>
    %12 = arith.addf %9, %11 : vector<32x128xf32>
    %cst_11 = arith.constant 0.000000e+00 : f32
    %13 = vector.broadcast %cst_11 : f32 to vector<32x128xf32>
    %14 = arith.maximumf %12, %13 : vector<32x128xf32>
    %c0_12 = arith.constant 0 : index
    %c0_13 = arith.constant 0 : index
    %15 = vector.load %arg6[%c0_12, %c0_13] : memref<128x128xf32, #tpu.memory_space<vmem>>, vector<128x128xf32>
    %cst_14 = arith.constant dense<0.000000e+00> : vector<32x128xf32>
    %16 = tpu.matmul %14, %15, %cst_14 {dimension_numbers = #tpu.dot_dimension_numbers<[1], [0], [0], [1], [0, 0, 1, 1], [], []>} : vector<32x128xf32>, vector<128x128xf32>, vector<32x128xf32> -> vector<32x128xf32>
    %c0_15 = arith.constant 0 : index
    %c0_16 = arith.constant 0 : index
    %17 = vector.load %arg7[%c0_15, %c0_16] : memref<1x128xf32, #tpu.memory_space<vmem>>, vector<1x128xf32>
    %18 = vector.broadcast %17 : vector<1x128xf32> to vector<32x128xf32>
    %19 = arith.addf %16, %18 : vector<32x128xf32>
    %c0_17 = arith.constant 0 : index
    %c0_18 = arith.constant 0 : index
    %20 = vector.load %arg8[%c0_17, %c0_18] : memref<32x128xf32, #tpu.memory_space<vmem>>, vector<32x128xf32>
    tpu.vector_store %arg8[%c0_17, %c0_18], %19 {strides = array<i32>} : memref<32x128xf32, #tpu.memory_space<vmem>>, vector<32x128xf32>,
    return
  }
  func.func @transform_0(%arg0: i32) -> (i32, i32) {
    %c0_i32 = arith.constant 0 : i32
    %c0_i32_0 = arith.constant 0 : i32
    return %arg0, %c0_i32 : i32, i32
  }
  func.func @transform_1(%arg0: i32) -> (i32, i32) {
    %c0_i32 = arith.constant 0 : i32
    %c0_i32_0 = arith.constant 0 : i32
    %c0_i32_1 = arith.constant 0 : i32
    return %c0_i32, %c0_i32_0 : i32, i32
  }
  func.func @transform_2(%arg0: i32) -> (i32, i32) {
    %c0_i32 = arith.constant 0 : i32
    %c0_i32_0 = arith.constant 0 : i32
    %c0_i32_1 = arith.constant 0 : i32
    return %c0_i32, %c0_i32_0 : i32, i32
  }
  func.func @transform_3(%arg0: i32) -> (i32, i32) {
    %c0_i32 = arith.constant 0 : i32
    %c0_i32_0 = arith.constant 0 : i32
    %c0_i32_1 = arith.constant 0 : i32
    return %c0_i32, %c0_i32_0 : i32, i32
  }
  func.func @transform_4(%arg0: i32) -> (i32, i32) {
    %c0_i32 = arith.constant 0 : i32
    %c0_i32_0 = arith.constant 0 : i32
    %c0_i32_1 = arith.constant 0 : i32
    return %c0_i32, %c0_i32_0 : i32, i32
  }
  func.func @transform_5(%arg0: i32) -> (i32, i32) {
    %c0_i32 = arith.constant 0 : i32
    %c0_i32_0 = arith.constant 0 : i32
    %c0_i32_1 = arith.constant 0 : i32
    return %c0_i32, %c0_i32_0 : i32, i32
  }
  func.func @transform_6(%arg0: i32) -> (i32, i32) {
    %c0_i32 = arith.constant 0 : i32
    %c0_i32_0 = arith.constant 0 : i32
    %c0_i32_1 = arith.constant 0 : i32
    return %c0_i32, %c0_i32_0 : i32, i32
  }
  func.func @transform_7(%arg0: i32) -> (i32, i32) {
    %c0_i32 = arith.constant 0 : i32
    %c0_i32_0 = arith.constant 0 : i32
    return %arg0, %c0_i32 : i32, i32
  }
}

</mosaic_0001>

<llo_original>
// kernel: _simple_nn_forward_impl.1
$region0: #{_simple_nn_forward_impl.1}
  #allocation0 [shape = 'u32[]', space=smem, size = 0x4, offset = 0x4, fixed_abs, tag = 'smem constant byte address 0x4 - core index']
  #allocation1 [shape = 'u32[144,128]{1,0:T(1,128)}', space=vmem, size = 0x12000, scoped, tag = 'internal scratch']
  %s0 = inlined_call_operand.vmem [shape: f32[128,32], index: 0, kind: input, shape index: {}]
  %s1 = inlined_call_operand.vmem [shape: f32[32,128], index: 1, kind: input, shape index: {}]
  %s2 = inlined_call_operand.vmem [shape: f32[1,128], index: 2, kind: input, shape index: {}]
  %s3 = inlined_call_operand.vmem [shape: f32[128,128], index: 3, kind: input, shape index: {}]
  %s4 = inlined_call_operand.vmem [shape: f32[1,128], index: 4, kind: input, shape index: {}]
  %s5 = inlined_call_operand.hbm [shape: f32[128,128], index: 5, kind: input, shape index: {}]
  %s6 = inlined_call_operand.vmem [shape: f32[1,128], index: 6, kind: input, shape index: {}]
  %s7 = inlined_call_operand.vmem [shape: f32[128,128], index: 7, kind: output, shape index: {}]
  %s8 = sld [smem:[#allocation0]]
  $region65: #{_simple_nn_forward_impl.1} parent=0
    _
  %s10 = ssub.s32 1, %s8
  %s11 = scalar_select 0, %s10, %s8
  $region1: #{_simple_nn_forward_impl.1} parent=0
    #allocation2 [shape = 'u8[65536]{0}', space=vmem, size = 0x10000, scoped, tag = 'input window, operand 5, single buffered']
    #allocation3 [shape = 's32[2]{0}', space=sflag, size = 0x8, scoped, tag = 'scoped memory for _simple_nn_forward_impl.1']
    %12 = vsyncpa [#allocation3], 0
    loop: start=0, step=1, limit=6
    $region2: #{_simple_nn_forward_impl.1} parent=1 // loop_pre_header
      _
    $region3: #{_simple_nn_forward_impl.1} parent=1 // loop_header
      %s14 = sphi 0, %s18
      %p15 = scmp.ge.s32.totalorder %s14, 6
      %s24 = sphi 0, %s26
      %s27 = sphi 0, %s24
      %s28 = sphi 0, %s27
      %s44 = sphi 0, %s28
      %s48 = sphi 0, %s48
      %s50 = sphi 0, %s48
      %s51 = sphi 0, %s50
      %s65 = sphi 0, %s51
      %s69 = sphi 0, %s69
      %s71 = sphi 0, %s69
      %s72 = sphi 0, %s71
      %s86 = sphi 0, %s72
      %s90 = sphi 0, %s90
      %s92 = sphi 0, %s90
      %s93 = sphi 0, %s92
      %s107 = sphi 0, %s93
      %s111 = sphi 0, %s111
      %s113 = sphi 0, %s111
      %s114 = sphi 0, %s113
      %s128 = sphi 0, %s114
      %s132 = sphi 0, %s132
      %s134 = sphi 0, %s132
      %s135 = sphi 0, %s134
      %s149 = sphi 0, %s135
      %s153 = sphi 0, %s153
      %s155 = sphi 0, %s153
      %s156 = sphi 0, %s155
      %s170 = sphi 0, %s156
      %s176 = sphi 0, %s178
      %s179 = sphi 0, %s176
      %s180 = sphi 0, %s179
      %s196 = sphi 0, %s180
    $region4: #{_simple_nn_forward_impl.1} parent=1 // loop_header_branch
      %17 = sbr.rel (%p15) target = $region8
    $region5: #{_simple_nn_forward_impl.1} parent=1 // loop_body
      %s19 = ssub.s32 %s14, 1
      %s20 = ssub.s32 %s14, 2
      %s21 = sadd.s32 %s14, 1
      %s22 = ssub.s32 %s14, %s21
      %p23 = scmp.eq.s32.totalorder %s22, 0
      %s25 = sadd.s32 %s24, 1
      %s26 = scalar_select %p23, %s24, %s25
      %p29 = pneg %p23
      %p30 = scmp.eq.s32.totalorder %s14, 3
      %p31 = por %p29, %p30
      %p32 = scmp.ne.s32.totalorder %s24, %s27
      %p33 = scmp.eq.s32.totalorder %s14, 0
      %p34 = por %p32, %p33
      %p35 = scmp.ne.s32.totalorder %s24, %s27
      %p36 = scmp.eq.s32.totalorder %s19, 3
      %p37 = por %p35, %p36
      %p38 = scmp.ne.s32.totalorder %s27, %s28
      %p39 = scmp.eq.s32.totalorder %s19, 0
      %p40 = por %p38, %p39
      %p41 = scmp.ne.s32.totalorder %s27, %s28
      %p42 = scmp.eq.s32.totalorder %s20, 3
      %p43 = por %p41, %p42
      %p45 = scmp.ne.s32.totalorder %s28, %s44
      %p46 = scmp.eq.s32.totalorder %s20, 0
      %p47 = por %p45, %p46
      %s49 = sadd.s32 %s48, 1
      %p52 = scmp.eq.s32.totalorder %s14, 3
      %p53 = scmp.ne.s32.totalorder %s48, %s50
      %p54 = scmp.eq.s32.totalorder %s14, 0
      %p55 = por %p53, %p54
      %p56 = scmp.ne.s32.totalorder %s48, %s50
      %p57 = scmp.eq.s32.totalorder %s19, 3
      %p58 = por %p56, %p57
      %p59 = scmp.ne.s32.totalorder %s50, %s51
      %p60 = scmp.eq.s32.totalorder %s19, 0
      %p61 = por %p59, %p60
      %p62 = scmp.ne.s32.totalorder %s50, %s51
      %p63 = scmp.eq.s32.totalorder %s20, 3
      %p64 = por %p62, %p63
      %p66 = scmp.ne.s32.totalorder %s51, %s65
      %p67 = scmp.eq.s32.totalorder %s20, 0
      %p68 = por %p66, %p67
      %s70 = sadd.s32 %s69, 1
      %p73 = scmp.eq.s32.totalorder %s14, 3
      %p74 = scmp.ne.s32.totalorder %s69, %s71
      %p75 = scmp.eq.s32.totalorder %s14, 0
      %p76 = por %p74, %p75
      %p77 = scmp.ne.s32.totalorder %s69, %s71
      %p78 = scmp.eq.s32.totalorder %s19, 3
      %p79 = por %p77, %p78
      %p80 = scmp.ne.s32.totalorder %s71, %s72
      %p81 = scmp.eq.s32.totalorder %s19, 0
      %p82 = por %p80, %p81
      %p83 = scmp.ne.s32.totalorder %s71, %s72
      %p84 = scmp.eq.s32.totalorder %s20, 3
      %p85 = por %p83, %p84
      %p87 = scmp.ne.s32.totalorder %s72, %s86
      %p88 = scmp.eq.s32.totalorder %s20, 0
      %p89 = por %p87, %p88
      %s91 = sadd.s32 %s90, 1
      %p94 = scmp.eq.s32.totalorder %s14, 3
      %p95 = scmp.ne.s32.totalorder %s90, %s92
      %p96 = scmp.eq.s32.totalorder %s14, 0
      %p97 = por %p95, %p96
      %p98 = scmp.ne.s32.totalorder %s90, %s92
      %p99 = scmp.eq.s32.totalorder %s19, 3
      %p100 = por %p98, %p99
      %p101 = scmp.ne.s32.totalorder %s92, %s93
      %p102 = scmp.eq.s32.totalorder %s19, 0
      %p103 = por %p101, %p102
      %p104 = scmp.ne.s32.totalorder %s92, %s93
      %p105 = scmp.eq.s32.totalorder %s20, 3
      %p106 = por %p104, %p105
      %p108 = scmp.ne.s32.totalorder %s93, %s107
      %p109 = scmp.eq.s32.totalorder %s20, 0
      %p110 = por %p108, %p109
      %s112 = sadd.s32 %s111, 1
      %p115 = scmp.eq.s32.totalorder %s14, 3
      %p116 = scmp.ne.s32.totalorder %s111, %s113
      %p117 = scmp.eq.s32.totalorder %s14, 0
      %p118 = por %p116, %p117
      %p119 = scmp.ne.s32.totalorder %s111, %s113
      %p120 = scmp.eq.s32.totalorder %s19, 3
      %p121 = por %p119, %p120
      %p122 = scmp.ne.s32.totalorder %s113, %s114
      %p123 = scmp.eq.s32.totalorder %s19, 0
      %p124 = por %p122, %p123
      %p125 = scmp.ne.s32.totalorder %s113, %s114
      %p126 = scmp.eq.s32.totalorder %s20, 3
      %p127 = por %p125, %p126
      %p129 = scmp.ne.s32.totalorder %s114, %s128
      %p130 = scmp.eq.s32.totalorder %s20, 0
      %p131 = por %p129, %p130
      %s133 = sadd.s32 %s132, 1
      %p136 = scmp.eq.s32.totalorder %s14, 3
      %p137 = scmp.ne.s32.totalorder %s132, %s134
      %p138 = scmp.eq.s32.totalorder %s14, 0
      %p139 = por %p137, %p138
      %p140 = scmp.ne.s32.totalorder %s132, %s134
      %p141 = scmp.eq.s32.totalorder %s19, 3
      %p142 = por %p140, %p141
      %p143 = scmp.ne.s32.totalorder %s134, %s135
      %p144 = scmp.eq.s32.totalorder %s19, 0
      %p145 = por %p143, %p144
      %p146 = scmp.ne.s32.totalorder %s134, %s135
      %p147 = scmp.eq.s32.totalorder %s20, 3
      %p148 = por %p146, %p147
      %p150 = scmp.ne.s32.totalorder %s135, %s149
      %p151 = scmp.eq.s32.totalorder %s20, 0
      %p152 = por %p150, %p151
      %s154 = sadd.s32 %s153, 1
      %p157 = scmp.eq.s32.totalorder %s14, 3
      %p158 = scmp.ne.s32.totalorder %s153, %s155
      %p159 = scmp.eq.s32.totalorder %s14, 0
      %p160 = por %p158, %p159
      %p161 = scmp.ne.s32.totalorder %s153, %s155
      %p162 = scmp.eq.s32.totalorder %s19, 3
      %p163 = por %p161, %p162
      %p164 = scmp.ne.s32.totalorder %s155, %s156
      %p165 = scmp.eq.s32.totalorder %s19, 0
      %p166 = por %p164, %p165
      %p167 = scmp.ne.s32.totalorder %s155, %s156
      %p168 = scmp.eq.s32.totalorder %s20, 3
      %p169 = por %p167, %p168
      %p171 = scmp.ne.s32.totalorder %s156, %s170
      %p172 = scmp.eq.s32.totalorder %s20, 0
      %p173 = por %p171, %p172
      %s174 = ssub.s32 %s14, %s21
      %p175 = scmp.eq.s32.totalorder %s174, 0
      %s177 = sadd.s32 %s176, 1
      %s178 = scalar_select %p175, %s176, %s177
      %p181 = pneg %p175
      %p182 = scmp.eq.s32.totalorder %s14, 3
      %p183 = por %p181, %p182
      %p184 = scmp.ne.s32.totalorder %s176, %s179
      %p185 = scmp.eq.s32.totalorder %s14, 0
      %p186 = por %p184, %p185
      %p187 = scmp.ne.s32.totalorder %s176, %s179
      %p188 = scmp.eq.s32.totalorder %s19, 3
      %p189 = por %p187, %p188
      %p190 = scmp.ne.s32.totalorder %s179, %s180
      %p191 = scmp.eq.s32.totalorder %s19, 0
      %p192 = por %p190, %p191
      %p193 = scmp.ne.s32.totalorder %s179, %s180
      %p194 = scmp.eq.s32.totalorder %s20, 3
      %p195 = por %p193, %p194
      %p197 = scmp.ne.s32.totalorder %s180, %s196
      %p198 = scmp.eq.s32.totalorder %s20, 0
      %p199 = por %p197, %p198
      %p200 = scmp.le.s32.totalorder 1, %s14
      %p201 = scmp.lt.s32.totalorder %s14, 5
      %p202 = pnand %p200, %p201
      %p203 = pneg %p202
      // Predicated region
      $region9: #{_simple_nn_forward_impl.1} parent=5 // pred_check
        _
      $region10: #{_simple_nn_forward_impl.1} parent=5 // pred_check_branch
        %205 = sbr.rel (%p202) target = $region12
      $region11: #{_simple_nn_forward_impl.1} parent=5 // pred_region
        %s206 = ssub.s32 %s14, 1
        // Predicated region
        $region13: #{_simple_nn_forward_impl.1} parent=11 // pred_check
          %p207 = pneg %p61
        $region14: #{_simple_nn_forward_impl.1} parent=11 // pred_check_branch
          %209 = sbr.rel (%p207) target = $region16
        $region15: #{_simple_nn_forward_impl.1} parent=11 // pred_region
          _
        $region16: #{_simple_nn_forward_impl.1} parent=11 // pred_fallthru
          _
        // Predicated region
        $region17: #{_simple_nn_forward_impl.1} parent=11 // pred_check
          %p210 = pneg %p82
        $region18: #{_simple_nn_forward_impl.1} parent=11 // pred_check_branch
          %212 = sbr.rel (%p210) target = $region20
        $region19: #{_simple_nn_forward_impl.1} parent=11 // pred_region
          _
        $region20: #{_simple_nn_forward_impl.1} parent=11 // pred_fallthru
          _
        // Predicated region
        $region21: #{_simple_nn_forward_impl.1} parent=11 // pred_check
          %p213 = pneg %p103
        $region22: #{_simple_nn_forward_impl.1} parent=11 // pred_check_branch
          %215 = sbr.rel (%p213) target = $region24
        $region23: #{_simple_nn_forward_impl.1} parent=11 // pred_region
          _
        $region24: #{_simple_nn_forward_impl.1} parent=11 // pred_fallthru
          _
        // Predicated region
        $region25: #{_simple_nn_forward_impl.1} parent=11 // pred_check
          %p216 = pneg %p124
        $region26: #{_simple_nn_forward_impl.1} parent=11 // pred_check_branch
          %218 = sbr.rel (%p216) target = $region28
        $region27: #{_simple_nn_forward_impl.1} parent=11 // pred_region
          _
        $region28: #{_simple_nn_forward_impl.1} parent=11 // pred_fallthru
          _
        // Predicated region
        $region29: #{_simple_nn_forward_impl.1} parent=11 // pred_check
          %p219 = pneg %p145
        $region30: #{_simple_nn_forward_impl.1} parent=11 // pred_check_branch
          %221 = sbr.rel (%p219) target = $region32
        $region31: #{_simple_nn_forward_impl.1} parent=11 // pred_region
          %s223 = ssub.s32 2048, 2048
          %224 = vsyncadd [#allocation3], %s223
          %s225 = sshll.u32 [#allocation2], 4
          %s226 = int_to_ptr.vmem [resolvable:$true] %s225
          %231 = dma.hbm_to_vmem [thread:$0]  %s5, 2048, %s226, [#allocation3], 128, 128, 8
        $region32: #{_simple_nn_forward_impl.1} parent=11 // pred_fallthru
          _
        // Predicated region
        $region33: #{_simple_nn_forward_impl.1} parent=11 // pred_check
          %p232 = pneg %p166
        $region34: #{_simple_nn_forward_impl.1} parent=11 // pred_check_branch
          %234 = sbr.rel (%p232) target = $region36
        $region35: #{_simple_nn_forward_impl.1} parent=11 // pred_region
          _
        $region36: #{_simple_nn_forward_impl.1} parent=11 // pred_fallthru
          _
      $region12: #{_simple_nn_forward_impl.1} parent=5 // pred_fallthru
        _
      %p235 = scmp.lt.s32.totalorder %s14, 4
      // Predicated region
      $region37: #{_simple_nn_forward_impl.1} parent=5 // pred_check
        %p236 = pneg %p235
      $region38: #{_simple_nn_forward_impl.1} parent=5 // pred_check_branch
        %238 = sbr.rel (%p236) target = $region40
      $region39: #{_simple_nn_forward_impl.1} parent=5 // pred_region
        // Predicated region
        $region41: #{_simple_nn_forward_impl.1} parent=39 // pred_check
          %p239 = pneg %p34
        $region42: #{_simple_nn_forward_impl.1} parent=39 // pred_check_branch
          %241 = sbr.rel (%p239) target = $region44
        $region43: #{_simple_nn_forward_impl.1} parent=39 // pred_region
          %s242 = smul.u32 4, %s14
          %p243 = scmp.lt.s32.totalorder %s242, 15
          %s244 = scalar_select %p243, %s242, 15
          %s245 = smul.addr %s244, 8
          %s246 = scalar_lea.vmem %s0, %s245
          %s247 = smul.u32 4, %s14
        $region44: #{_simple_nn_forward_impl.1} parent=39 // pred_fallthru
          _
      $region40: #{_simple_nn_forward_impl.1} parent=5 // pred_fallthru
        _
      %p248 = scmp.le.s32.totalorder 1, %s14
      %p249 = scmp.lt.s32.totalorder %s14, 5
      %p250 = pnand %p248, %p249
      %p251 = pneg %p250
      // Predicated region
      $region45: #{_simple_nn_forward_impl.1} parent=5 // pred_check
        _
      $region46: #{_simple_nn_forward_impl.1} parent=5 // pred_check_branch
        %253 = sbr.rel (%p250) target = $region48
      $region47: #{_simple_nn_forward_impl.1} parent=5 // pred_region
        %s254 = ssub.s32 %s14, 1
        // Predicated region
        $region49: #{_simple_nn_forward_impl.1} parent=47 // pred_check
          %p255 = pneg %p145
        $region50: #{_simple_nn_forward_impl.1} parent=47 // pred_check_branch
          %257 = sbr.rel (%p255) target = $region52
        $region51: #{_simple_nn_forward_impl.1} parent=47 // pred_region
          %258 = dma.done [#allocation3], 2048
        $region52: #{_simple_nn_forward_impl.1} parent=47 // pred_fallthru
          _
        %s259 = smul.u32 4, %s19
        %p260 = scmp.lt.s32.totalorder %s259, 15
        %s261 = scalar_select %p260, %s259, 15
        %s262 = smul.addr %s261, 8
        %s263 = scalar_lea.vmem %s0, %s262
        %p264 = pneg %p40
        %p265 = pneg %p37
        %p266 = pneg %p61
        %p267 = pneg %p58
        %p268 = pneg %p82
        %p269 = pneg %p79
        %p270 = pneg %p103
        %p271 = pneg %p100
        %p272 = pneg %p124
        %p273 = pneg %p121
        %p274 = pneg %p145
        %p275 = pneg %p142
        %p276 = pneg %p166
        %p277 = pneg %p163
        %p278 = pneg %p192
        %p279 = pneg %p189
        %s280 = smul.u32 4, %s19
        %p281 = scmp.lt.s32.totalorder %s280, 15
        %s282 = scalar_select %p281, %s280, 15
        %s283 = smul.addr %s282, 8
        %s284 = scalar_lea.vmem %s7, %s283
        %s285 = smul.u32 4, %s19
        %p286 = scmp.lt.s32.totalorder %s285, 15
        %s287 = scalar_select %p286, %s285, 15
        %s288 = smul.addr %s287, 8
        %s289 = scalar_lea.vmem %s0, %s288
        %s290 = smul.u32 4, %s19
        %s291 = smul.u32 4, %s19
        %p292 = scmp.lt.s32.totalorder %s291, 15
        %s293 = scalar_select %p292, %s291, 15
        %s294 = smul.addr %s293, 8
        %s295 = scalar_lea.vmem %s7, %s294
        %s296 = smul.u32 4, %s19
        %v297 = vld [vmem:[%s289] sm:$0xff]
        %v298 = vld [vmem:[%s289 + $0x8] sm:$0xff]
        %v299 = vld [vmem:[%s289 + $0x10] sm:$0xff]
        %v300 = vld [vmem:[%s289 + $0x18] sm:$0xff]
        %v301 = vld [vmem:[%s1] sm:$0xff]
        %v302 = vld [vmem:[%s1 + $0x8] sm:$0xff]
        %v303 = vld [vmem:[%s1 + $0x10] sm:$0xff]
        %v304 = vld [vmem:[%s1 + $0x18] sm:$0xff]
        %v305 = vld [vmem:[%s2] sm:$0x1]
        %v307 = vlaneseq
        %v308 = vshrl.u32 %v307, 7
        %v309 = vsub.s32 0, %v308
        %v310 = vrot.slane %v305, %v309
        %vm312 = vcmask 261120
        %v314 = vsel %vm312, %v297, 0
        %v317 = vsel %vm312, %v298, 0
        %v320 = vsel %vm312, %v299, 0
        %v323 = vsel %vm312, %v300, 0
        %325 = vmatprep.subr.mxu0 0.0
        %326 = vmatpush1.msra.mxu0 0.0
        %327 = vmatprep.subr.mxu0 0.0
        %328 = vmatpush1.msra.mxu0 0.0
        %329 = vmatprep.subr.mxu0 0.0
        %330 = vmatpush1.msra.mxu0 0.0
        %331 = vmatprep.subr.mxu0 0.0
        %332 = vmatpush1.msra.mxu0 0.0
        %333 = vmatprep.subr.mxu0 0.0
        %334 = vmatpush1.msra.mxu0 0.0
        %335 = vmatprep.subr.mxu0 0.0
        %336 = vmatpush1.msra.mxu0 0.0
        %337 = vmatprep.subr.mxu0 0.0
        %338 = vmatpush1.msra.mxu0 0.0
        %339 = vmatprep.subr.mxu0 0.0
        %340 = vmatpush1.msra.mxu0 0.0
        %341 = vmatprep.subr.mxu0 0.0
        %342 = vmatpush1.msra.mxu0 0.0
        %343 = vmatprep.subr.mxu0 0.0
        %344 = vmatpush1.msra.mxu0 0.0
        %345 = vmatprep.subr.mxu0 0.0
        %346 = vmatpush1.msra.mxu0 0.0
        %347 = vmatprep.subr.mxu0 0.0
        %348 = vmatpush1.msra.mxu0 0.0
        %349 = vmatprep.subr.mxu0 0.0
        %350 = vmatpush1.msra.mxu0 %v304
        %351 = vmatprep.subr.mxu0 0.0
        %352 = vmatpush1.msra.mxu0 %v303
        %353 = vmatprep.subr.mxu0 0.0
        %354 = vmatpush1.msra.mxu0 %v302
        %355 = vmatprep.subr.mxu0 0.0
        %356 = vmatpush1.msra.mxu0 %v301
        %357 = vmatprep.subr.mxu0 0.0
        %358 = vmatpush2.msra.mxu0 0.0
        %359 = vmatprep.subr.mxu0 0.0
        %360 = vmatpush2.msra.mxu0 0.0
        %361 = vmatprep.subr.mxu0 0.0
        %362 = vmatpush2.msra.mxu0 0.0
        %363 = vmatprep.subr.mxu0 0.0
        %364 = vmatpush2.msra.mxu0 0.0
        %365 = vmatprep.subr.mxu0 0.0
        %366 = vmatpush2.msra.mxu0 0.0
        %367 = vmatprep.subr.mxu0 0.0
        %368 = vmatpush2.msra.mxu0 0.0
        %369 = vmatprep.subr.mxu0 0.0
        %370 = vmatpush2.msra.mxu0 0.0
        %371 = vmatprep.subr.mxu0 0.0
        %372 = vmatpush2.msra.mxu0 0.0
        %373 = vmatprep.subr.mxu0 0.0
        %374 = vmatpush2.msra.mxu0 0.0
        %375 = vmatprep.subr.mxu0 0.0
        %376 = vmatpush2.msra.mxu0 0.0
        %377 = vmatprep.subr.mxu0 0.0
        %378 = vmatpush2.msra.mxu0 0.0
        %379 = vmatprep.subr.mxu0 0.0
        %380 = vmatpush2.msra.mxu0 0.0
        %381 = vmatprep.subr.mxu0 0.0
        %382 = vmatpush2.msra.mxu0 0.0
        %383 = vmatprep.subr.mxu0 0.0
        %384 = vmatpush2.msra.mxu0 0.0
        %385 = vmatprep.subr.mxu0 0.0
        %386 = vmatpush2.msra.mxu0 0.0
        %387 = vmatprep.subr.mxu0 0.0
        %388 = vmatpush2.msra.mxu0 0.0
        %389 = vmatprep.mubr.f32.mxu0 0.0
        %390 = vmatmul.mubr.f32.gmra.mxu0 %v314
        %v391 = vpop.f32.mrf.mxu0
        %v392 = vadd.f32 %v310, %v391
        %v393 = vpop.f32.mrf.mxu0
        %394 = vmatprep.mubr.f32.mxu0 0.0
        %395 = vmatmul.mubr.f32.gmra.mxu0 %v317
        %v396 = vpop.f32.mrf.mxu0
        %v397 = vadd.f32 %v310, %v396
        %v398 = vpop.f32.mrf.mxu0
        %399 = vmatprep.mubr.f32.mxu0 0.0
        %400 = vmatmul.mubr.f32.gmra.mxu0 %v320
        %v401 = vpop.f32.mrf.mxu0
        %v402 = vadd.f32 %v310, %v401
        %v403 = vpop.f32.mrf.mxu0
        %404 = vmatprep.mubr.f32.mxu0 0.0
        %405 = vmatmul.mubr.f32.gmra.mxu0 %v323
        %v406 = vpop.f32.mrf.mxu0
        %v407 = vadd.f32 %v310, %v406
        %v408 = vpop.f32.mrf.mxu0
        %409 = vdwg.mxu0
        %v410 = vmax.f32 %v392, 0.0
        %v411 = vmax.f32 %v397, 0.0
        %v412 = vmax.f32 %v402, 0.0
        %v413 = vmax.f32 %v407, 0.0
        %v414 = vld [vmem:[%s3] sm:$0xff]
        %v415 = vld [vmem:[%s3 + $0x8] sm:$0xff]
        %v416 = vld [vmem:[%s3 + $0x10] sm:$0xff]
        %v417 = vld [vmem:[%s3 + $0x18] sm:$0xff]
        %v418 = vld [vmem:[%s3 + $0x20] sm:$0xff]
        %v419 = vld [vmem:[%s3 + $0x28] sm:$0xff]
        %v420 = vld [vmem:[%s3 + $0x30] sm:$0xff]
        %v421 = vld [vmem:[%s3 + $0x38] sm:$0xff]
        %v422 = vld [vmem:[%s3 + $0x40] sm:$0xff]
        %v423 = vld [vmem:[%s3 + $0x48] sm:$0xff]
        %v424 = vld [vmem:[%s3 + $0x50] sm:$0xff]
        %v425 = vld [vmem:[%s3 + $0x58] sm:$0xff]
        %v426 = vld [vmem:[%s3 + $0x60] sm:$0xff]
        %v427 = vld [vmem:[%s3 + $0x68] sm:$0xff]
        %v428 = vld [vmem:[%s3 + $0x70] sm:$0xff]
        %v429 = vld [vmem:[%s3 + $0x78] sm:$0xff]
        %v430 = vld [vmem:[%s4] sm:$0x1]
        %v432 = vlaneseq
        %v433 = vshrl.u32 %v432, 7
        %v434 = vsub.s32 0, %v433
        %v435 = vrot.slane %v430, %v434
        %437 = vmatprep.subr.mxu0 0.0
        %438 = vmatpush1.msra.mxu0 %v429
        %439 = vmatprep.subr.mxu0 0.0
        %440 = vmatpush1.msra.mxu0 %v428
        %441 = vmatprep.subr.mxu0 0.0
        %442 = vmatpush1.msra.mxu0 %v427
        %443 = vmatprep.subr.mxu0 0.0
        %444 = vmatpush1.msra.mxu0 %v426
        %445 = vmatprep.subr.mxu0 0.0
        %446 = vmatpush1.msra.mxu0 %v425
        %447 = vmatprep.subr.mxu0 0.0
        %448 = vmatpush1.msra.mxu0 %v424
        %449 = vmatprep.subr.mxu0 0.0
        %450 = vmatpush1.msra.mxu0 %v423
        %451 = vmatprep.subr.mxu0 0.0
        %452 = vmatpush1.msra.mxu0 %v422
        %453 = vmatprep.subr.mxu0 0.0
        %454 = vmatpush1.msra.mxu0 %v421
        %455 = vmatprep.subr.mxu0 0.0
        %456 = vmatpush1.msra.mxu0 %v420
        %457 = vmatprep.subr.mxu0 0.0
        %458 = vmatpush1.msra.mxu0 %v419
        %459 = vmatprep.subr.mxu0 0.0
        %460 = vmatpush1.msra.mxu0 %v418
        %461 = vmatprep.subr.mxu0 0.0
        %462 = vmatpush1.msra.mxu0 %v417
        %463 = vmatprep.subr.mxu0 0.0
        %464 = vmatpush1.msra.mxu0 %v416
        %465 = vmatprep.subr.mxu0 0.0
        %466 = vmatpush1.msra.mxu0 %v415
        %467 = vmatprep.subr.mxu0 0.0
        %468 = vmatpush1.msra.mxu0 %v414
        %469 = vmatprep.subr.mxu0 0.0
        %470 = vmatpush2.msra.mxu0 0.0
        %471 = vmatprep.subr.mxu0 0.0
        %472 = vmatpush2.msra.mxu0 0.0
        %473 = vmatprep.subr.mxu0 0.0
        %474 = vmatpush2.msra.mxu0 0.0
        %475 = vmatprep.subr.mxu0 0.0
        %476 = vmatpush2.msra.mxu0 0.0
        %477 = vmatprep.subr.mxu0 0.0
        %478 = vmatpush2.msra.mxu0 0.0
        %479 = vmatprep.subr.mxu0 0.0
        %480 = vmatpush2.msra.mxu0 0.0
        %481 = vmatprep.subr.mxu0 0.0
        %482 = vmatpush2.msra.mxu0 0.0
        %483 = vmatprep.subr.mxu0 0.0
        %484 = vmatpush2.msra.mxu0 0.0
        %485 = vmatprep.subr.mxu0 0.0
        %486 = vmatpush2.msra.mxu0 0.0
        %487 = vmatprep.subr.mxu0 0.0
        %488 = vmatpush2.msra.mxu0 0.0
        %489 = vmatprep.subr.mxu0 0.0
        %490 = vmatpush2.msra.mxu0 0.0
        %491 = vmatprep.subr.mxu0 0.0
        %492 = vmatpush2.msra.mxu0 0.0
        %493 = vmatprep.subr.mxu0 0.0
        %494 = vmatpush2.msra.mxu0 0.0
        %495 = vmatprep.subr.mxu0 0.0
        %496 = vmatpush2.msra.mxu0 0.0
        %497 = vmatprep.subr.mxu0 0.0
        %498 = vmatpush2.msra.mxu0 0.0
        %499 = vmatprep.subr.mxu0 0.0
        %500 = vmatpush2.msra.mxu0 0.0
        %501 = vmatprep.mubr.f32.mxu0 0.0
        %502 = vmatmul.mubr.f32.gmra.mxu0 %v410
        %v503 = vpop.f32.mrf.mxu0
        %v504 = vadd.f32 %v435, %v503
        %v505 = vpop.f32.mrf.mxu0
        %506 = vmatprep.mubr.f32.mxu0 0.0
        %507 = vmatmul.mubr.f32.gmra.mxu0 %v411
        %v508 = vpop.f32.mrf.mxu0
        %v509 = vadd.f32 %v435, %v508
        %v510 = vpop.f32.mrf.mxu0
        %511 = vmatprep.mubr.f32.mxu0 0.0
        %512 = vmatmul.mubr.f32.gmra.mxu0 %v412
        %v513 = vpop.f32.mrf.mxu0
        %v514 = vadd.f32 %v435, %v513
        %v515 = vpop.f32.mrf.mxu0
        %516 = vmatprep.mubr.f32.mxu0 0.0
        %517 = vmatmul.mubr.f32.gmra.mxu0 %v413
        %v518 = vpop.f32.mrf.mxu0
        %v519 = vadd.f32 %v435, %v518
        %v520 = vpop.f32.mrf.mxu0
        %521 = vdwg.mxu0
        %v522 = vmax.f32 %v504, 0.0
        %v523 = vmax.f32 %v509, 0.0
        %v524 = vmax.f32 %v514, 0.0
        %v525 = vmax.f32 %v519, 0.0
        %v526 = vld [vmem:[#allocation2] sm:$0xff]
        %v527 = vld [vmem:[#allocation2 + $0x8] sm:$0xff]
        %v528 = vld [vmem:[#allocation2 + $0x10] sm:$0xff]
        %v529 = vld [vmem:[#allocation2 + $0x18] sm:$0xff]
        %v530 = vld [vmem:[#allocation2 + $0x20] sm:$0xff]
        %v531 = vld [vmem:[#allocation2 + $0x28] sm:$0xff]
        %v532 = vld [vmem:[#allocation2 + $0x30] sm:$0xff]
        %v533 = vld [vmem:[#allocation2 + $0x38] sm:$0xff]
        %v534 = vld [vmem:[#allocation2 + $0x40] sm:$0xff]
        %v535 = vld [vmem:[#allocation2 + $0x48] sm:$0xff]
        %v536 = vld [vmem:[#allocation2 + $0x50] sm:$0xff]
        %v537 = vld [vmem:[#allocation2 + $0x58] sm:$0xff]
        %v538 = vld [vmem:[#allocation2 + $0x60] sm:$0xff]
        %v539 = vld [vmem:[#allocation2 + $0x68] sm:$0xff]
        %v540 = vld [vmem:[#allocation2 + $0x70] sm:$0xff]
        %v541 = vld [vmem:[#allocation2 + $0x78] sm:$0xff]
        %v542 = vld [vmem:[%s6] sm:$0x1]
        %v544 = vlaneseq
        %v545 = vshrl.u32 %v544, 7
        %v546 = vsub.s32 0, %v545
        %v547 = vrot.slane %v542, %v546
        %549 = vmatprep.subr.mxu0 0.0
        %550 = vmatpush1.msra.mxu0 %v541
        %551 = vmatprep.subr.mxu0 0.0
        %552 = vmatpush1.msra.mxu0 %v540
        %553 = vmatprep.subr.mxu0 0.0
        %554 = vmatpush1.msra.mxu0 %v539
        %555 = vmatprep.subr.mxu0 0.0
        %556 = vmatpush1.msra.mxu0 %v538
        %557 = vmatprep.subr.mxu0 0.0
        %558 = vmatpush1.msra.mxu0 %v537
        %559 = vmatprep.subr.mxu0 0.0
        %560 = vmatpush1.msra.mxu0 %v536
        %561 = vmatprep.subr.mxu0 0.0
        %562 = vmatpush1.msra.mxu0 %v535
        %563 = vmatprep.subr.mxu0 0.0
        %564 = vmatpush1.msra.mxu0 %v534
        %565 = vmatprep.subr.mxu0 0.0
        %566 = vmatpush1.msra.mxu0 %v533
        %567 = vmatprep.subr.mxu0 0.0
        %568 = vmatpush1.msra.mxu0 %v532
        %569 = vmatprep.subr.mxu0 0.0
        %570 = vmatpush1.msra.mxu0 %v531
        %571 = vmatprep.subr.mxu0 0.0
        %572 = vmatpush1.msra.mxu0 %v530
        %573 = vmatprep.subr.mxu0 0.0
        %574 = vmatpush1.msra.mxu0 %v529
        %575 = vmatprep.subr.mxu0 0.0
        %576 = vmatpush1.msra.mxu0 %v528
        %577 = vmatprep.subr.mxu0 0.0
        %578 = vmatpush1.msra.mxu0 %v527
        %579 = vmatprep.subr.mxu0 0.0
        %580 = vmatpush1.msra.mxu0 %v526
        %581 = vmatprep.subr.mxu0 0.0
        %582 = vmatpush2.msra.mxu0 0.0
        %583 = vmatprep.subr.mxu0 0.0
        %584 = vmatpush2.msra.mxu0 0.0
        %585 = vmatprep.subr.mxu0 0.0
        %586 = vmatpush2.msra.mxu0 0.0
        %587 = vmatprep.subr.mxu0 0.0
        %588 = vmatpush2.msra.mxu0 0.0
        %589 = vmatprep.subr.mxu0 0.0
        %590 = vmatpush2.msra.mxu0 0.0
        %591 = vmatprep.subr.mxu0 0.0
        %592 = vmatpush2.msra.mxu0 0.0
        %593 = vmatprep.subr.mxu0 0.0
        %594 = vmatpush2.msra.mxu0 0.0
        %595 = vmatprep.subr.mxu0 0.0
        %596 = vmatpush2.msra.mxu0 0.0
        %597 = vmatprep.subr.mxu0 0.0
        %598 = vmatpush2.msra.mxu0 0.0
        %599 = vmatprep.subr.mxu0 0.0
        %600 = vmatpush2.msra.mxu0 0.0
        %601 = vmatprep.subr.mxu0 0.0
        %602 = vmatpush2.msra.mxu0 0.0
        %603 = vmatprep.subr.mxu0 0.0
        %604 = vmatpush2.msra.mxu0 0.0
        %605 = vmatprep.subr.mxu0 0.0
        %606 = vmatpush2.msra.mxu0 0.0
        %607 = vmatprep.subr.mxu0 0.0
        %608 = vmatpush2.msra.mxu0 0.0
        %609 = vmatprep.subr.mxu0 0.0
        %610 = vmatpush2.msra.mxu0 0.0
        %611 = vmatprep.subr.mxu0 0.0
        %612 = vmatpush2.msra.mxu0 0.0
        %613 = vmatprep.mubr.f32.mxu0 0.0
        %614 = vmatmul.mubr.f32.gmra.mxu0 %v522
        %v615 = vpop.f32.mrf.mxu0
        %v616 = vadd.f32 %v547, %v615
        %v617 = vpop.f32.mrf.mxu0
        %618 = vmatprep.mubr.f32.mxu0 0.0
        %619 = vmatmul.mubr.f32.gmra.mxu0 %v523
        %v620 = vpop.f32.mrf.mxu0
        %v621 = vadd.f32 %v547, %v620
        %v622 = vpop.f32.mrf.mxu0
        %623 = vmatprep.mubr.f32.mxu0 0.0
        %624 = vmatmul.mubr.f32.gmra.mxu0 %v524
        %v625 = vpop.f32.mrf.mxu0
        %v626 = vadd.f32 %v547, %v625
        %v627 = vpop.f32.mrf.mxu0
        %628 = vmatprep.mubr.f32.mxu0 0.0
        %629 = vmatmul.mubr.f32.gmra.mxu0 %v525
        %v630 = vpop.f32.mrf.mxu0
        %v631 = vadd.f32 %v547, %v630
        %v632 = vpop.f32.mrf.mxu0
        %633 = vdwg.mxu0
        %634 = vst [vmem:[%s295] sm:$0xff] %v616
        %635 = vst [vmem:[%s295 + $0x8] sm:$0xff] %v621
        %636 = vst [vmem:[%s295 + $0x10] sm:$0xff] %v626
        %637 = vst [vmem:[%s295 + $0x18] sm:$0xff] %v631
        %s638 = smul.u32 4, %s19
        %p639 = scmp.lt.s32.totalorder %s638, 15
        %s640 = scalar_select %p639, %s638, 15
        %s641 = smul.addr %s640, 8
        %s642 = scalar_lea.vmem %s7, %s641
        // Predicated region
        $region53: #{_simple_nn_forward_impl.1} parent=47 // pred_check
          %p643 = pneg %p189
        $region54: #{_simple_nn_forward_impl.1} parent=47 // pred_check_branch
          %645 = sbr.rel (%p643) target = $region56
        $region55: #{_simple_nn_forward_impl.1} parent=47 // pred_region
          %s646 = smul.u32 4, %s19
        $region56: #{_simple_nn_forward_impl.1} parent=47 // pred_fallthru
          _
      $region48: #{_simple_nn_forward_impl.1} parent=5 // pred_fallthru
        _
      %p647 = scmp.le.s32.totalorder 2, %s14
      // Predicated region
      $region57: #{_simple_nn_forward_impl.1} parent=5 // pred_check
        %p648 = pneg %p647
      $region58: #{_simple_nn_forward_impl.1} parent=5 // pred_check_branch
        %650 = sbr.rel (%p648) target = $region60
      $region59: #{_simple_nn_forward_impl.1} parent=5 // pred_region
        %s651 = ssub.s32 %s14, 2
        // Predicated region
        $region61: #{_simple_nn_forward_impl.1} parent=59 // pred_check
          %p652 = pneg %p195
        $region62: #{_simple_nn_forward_impl.1} parent=59 // pred_check_branch
          %654 = sbr.rel (%p652) target = $region64
        $region63: #{_simple_nn_forward_impl.1} parent=59 // pred_region
          %s655 = smul.u32 4, %s20
          %p656 = scmp.lt.s32.totalorder %s655, 15
          %s657 = scalar_select %p656, %s655, 15
          %s658 = smul.addr %s657, 8
          %s659 = scalar_lea.vmem %s7, %s658
        $region64: #{_simple_nn_forward_impl.1} parent=59 // pred_fallthru
          _
      $region60: #{_simple_nn_forward_impl.1} parent=5 // pred_fallthru
        _
    $region6: #{_simple_nn_forward_impl.1} parent=1 // loop_footer
      %s18 = sadd.s32 1, %s14
    $region7: #{_simple_nn_forward_impl.1} parent=1 // loop_footer_branch
      %13 = sbr.rel target = $region3
    $region8: #{_simple_nn_forward_impl.1} parent=1 // loop_exit
      _
    %660 = vsyncpa [#allocation3], 1
    %s661 = scalar_lea.sflag [#allocation3], 1
    %662 = vsyncpa %s661, 1

// kernel: _simple_nn_forward_impl.1
$region0: #{_simple_nn_forward_impl.1}
  #allocation0 [shape = 'u32[]', space=smem, size = 0x4, offset = 0x4, fixed_abs, tag = 'smem constant byte address 0x4 - core index']
  #allocation1 [shape = 'u32[144,128]{1,0:T(1,128)}', space=vmem, size = 0x12000, scoped, tag = 'internal scratch']
  %s0 = inlined_call_operand.vmem [shape: f32[128,32], index: 0, kind: input, shape index: {}]
  %s1 = inlined_call_operand.vmem [shape: f32[32,128], index: 1, kind: input, shape index: {}]
  %s2 = inlined_call_operand.vmem [shape: f32[1,128], index: 2, kind: input, shape index: {}]
  %s3 = inlined_call_operand.vmem [shape: f32[128,128], index: 3, kind: input, shape index: {}]
  %s4 = inlined_call_operand.vmem [shape: f32[1,128], index: 4, kind: input, shape index: {}]
  %s5 = inlined_call_operand.hbm [shape: f32[128,128], index: 5, kind: input, shape index: {}]
  %s6 = inlined_call_operand.vmem [shape: f32[1,128], index: 6, kind: input, shape index: {}]
  %s7 = inlined_call_operand.vmem [shape: f32[128,128], index: 7, kind: output, shape index: {}]
  %s8 = sld [smem:[#allocation0]]
  $region65: #{_simple_nn_forward_impl.1} parent=0
    _
  %s10 = ssub.s32 1, %s8
  %s11 = scalar_select 0, %s10, %s8
  $region1: #{_simple_nn_forward_impl.1} parent=0
    #allocation2 [shape = 'u8[65536]{0}', space=vmem, size = 0x10000, scoped, tag = 'input window, operand 5, single buffered']
    #allocation3 [shape = 's32[2]{0}', space=sflag, size = 0x8, scoped, tag = 'scoped memory for _simple_nn_forward_impl.1']
    %12 = vsyncpa [#allocation3], 0
    loop: start=0, step=1, limit=6
    $region2: #{_simple_nn_forward_impl.1} parent=1 // loop_pre_header
      _
    $region3: #{_simple_nn_forward_impl.1} parent=1 // loop_header
      %s14 = sphi 0, %s18
      %p15 = scmp.ge.s32.totalorder %s14, 6
      %s24 = sphi 0, %s26
      %s27 = sphi 0, %s24
      %s28 = sphi 0, %s27
      %s44 = sphi 0, %s28
      %s48 = sphi 0, %s48
      %s50 = sphi 0, %s48
      %s51 = sphi 0, %s50
      %s65 = sphi 0, %s51
      %s69 = sphi 0, %s69
      %s71 = sphi 0, %s69
      %s72 = sphi 0, %s71
      %s86 = sphi 0, %s72
      %s90 = sphi 0, %s90
      %s92 = sphi 0, %s90
      %s93 = sphi 0, %s92
      %s107 = sphi 0, %s93
      %s111 = sphi 0, %s111
      %s113 = sphi 0, %s111
      %s114 = sphi 0, %s113
      %s128 = sphi 0, %s114
      %s132 = sphi 0, %s132
      %s134 = sphi 0, %s132
      %s135 = sphi 0, %s134
      %s149 = sphi 0, %s135
      %s153 = sphi 0, %s153
      %s155 = sphi 0, %s153
      %s156 = sphi 0, %s155
      %s170 = sphi 0, %s156
      %s176 = sphi 0, %s178
      %s179 = sphi 0, %s176
      %s180 = sphi 0, %s179
      %s196 = sphi 0, %s180
    $region4: #{_simple_nn_forward_impl.1} parent=1 // loop_header_branch
      %17 = sbr.rel (%p15) target = $region8
    $region5: #{_simple_nn_forward_impl.1} parent=1 // loop_body
      %s19 = ssub.s32 %s14, 1
      %s20 = ssub.s32 %s14, 2
      %s21 = sadd.s32 %s14, 1
      %s22 = ssub.s32 %s14, %s21
      %p23 = scmp.eq.s32.totalorder %s22, 0
      %s25 = sadd.s32 %s24, 1
      %s26 = scalar_select %p23, %s24, %s25
      %p29 = pneg %p23
      %p30 = scmp.eq.s32.totalorder %s14, 3
      %p31 = por %p29, %p30
      %p32 = scmp.ne.s32.totalorder %s24, %s27
      %p33 = scmp.eq.s32.totalorder %s14, 0
      %p34 = por %p32, %p33
      %p35 = scmp.ne.s32.totalorder %s24, %s27
      %p36 = scmp.eq.s32.totalorder %s19, 3
      %p37 = por %p35, %p36
      %p38 = scmp.ne.s32.totalorder %s27, %s28
      %p39 = scmp.eq.s32.totalorder %s19, 0
      %p40 = por %p38, %p39
      %p41 = scmp.ne.s32.totalorder %s27, %s28
      %p42 = scmp.eq.s32.totalorder %s20, 3
      %p43 = por %p41, %p42
      %p45 = scmp.ne.s32.totalorder %s28, %s44
      %p46 = scmp.eq.s32.totalorder %s20, 0
      %p47 = por %p45, %p46
      %s49 = sadd.s32 %s48, 1
      %p52 = scmp.eq.s32.totalorder %s14, 3
      %p53 = scmp.ne.s32.totalorder %s48, %s50
      %p54 = scmp.eq.s32.totalorder %s14, 0
      %p55 = por %p53, %p54
      %p56 = scmp.ne.s32.totalorder %s48, %s50
      %p57 = scmp.eq.s32.totalorder %s19, 3
      %p58 = por %p56, %p57
      %p59 = scmp.ne.s32.totalorder %s50, %s51
      %p60 = scmp.eq.s32.totalorder %s19, 0
      %p61 = por %p59, %p60
      %p62 = scmp.ne.s32.totalorder %s50, %s51
      %p63 = scmp.eq.s32.totalorder %s20, 3
      %p64 = por %p62, %p63
      %p66 = scmp.ne.s32.totalorder %s51, %s65
      %p67 = scmp.eq.s32.totalorder %s20, 0
      %p68 = por %p66, %p67
      %s70 = sadd.s32 %s69, 1
      %p73 = scmp.eq.s32.totalorder %s14, 3
      %p74 = scmp.ne.s32.totalorder %s69, %s71
      %p75 = scmp.eq.s32.totalorder %s14, 0
      %p76 = por %p74, %p75
      %p77 = scmp.ne.s32.totalorder %s69, %s71
      %p78 = scmp.eq.s32.totalorder %s19, 3
      %p79 = por %p77, %p78
      %p80 = scmp.ne.s32.totalorder %s71, %s72
      %p81 = scmp.eq.s32.totalorder %s19, 0
      %p82 = por %p80, %p81
      %p83 = scmp.ne.s32.totalorder %s71, %s72
      %p84 = scmp.eq.s32.totalorder %s20, 3
      %p85 = por %p83, %p84
      %p87 = scmp.ne.s32.totalorder %s72, %s86
      %p88 = scmp.eq.s32.totalorder %s20, 0
      %p89 = por %p87, %p88
      %s91 = sadd.s32 %s90, 1
      %p94 = scmp.eq.s32.totalorder %s14, 3
      %p95 = scmp.ne.s32.totalorder %s90, %s92
      %p96 = scmp.eq.s32.totalorder %s14, 0
      %p97 = por %p95, %p96
      %p98 = scmp.ne.s32.totalorder %s90, %s92
      %p99 = scmp.eq.s32.totalorder %s19, 3
      %p100 = por %p98, %p99
      %p101 = scmp.ne.s32.totalorder %s92, %s93
      %p102 = scmp.eq.s32.totalorder %s19, 0
      %p103 = por %p101, %p102
      %p104 = scmp.ne.s32.totalorder %s92, %s93
      %p105 = scmp.eq.s32.totalorder %s20, 3
      %p106 = por %p104, %p105
      %p108 = scmp.ne.s32.totalorder %s93, %s107
      %p109 = scmp.eq.s32.totalorder %s20, 0
      %p110 = por %p108, %p109
      %s112 = sadd.s32 %s111, 1
      %p115 = scmp.eq.s32.totalorder %s14, 3
      %p116 = scmp.ne.s32.totalorder %s111, %s113
      %p117 = scmp.eq.s32.totalorder %s14, 0
      %p118 = por %p116, %p117
      %p119 = scmp.ne.s32.totalorder %s111, %s113
      %p120 = scmp.eq.s32.totalorder %s19, 3
      %p121 = por %p119, %p120
      %p122 = scmp.ne.s32.totalorder %s113, %s114
      %p123 = scmp.eq.s32.totalorder %s19, 0
      %p124 = por %p122, %p123
      %p125 = scmp.ne.s32.totalorder %s113, %s114
      %p126 = scmp.eq.s32.totalorder %s20, 3
      %p127 = por %p125, %p126
      %p129 = scmp.ne.s32.totalorder %s114, %s128
      %p130 = scmp.eq.s32.totalorder %s20, 0
      %p131 = por %p129, %p130
      %s133 = sadd.s32 %s132, 1
      %p136 = scmp.eq.s32.totalorder %s14, 3
      %p137 = scmp.ne.s32.totalorder %s132, %s134
      %p138 = scmp.eq.s32.totalorder %s14, 0
      %p139 = por %p137, %p138
      %p140 = scmp.ne.s32.totalorder %s132, %s134
      %p141 = scmp.eq.s32.totalorder %s19, 3
      %p142 = por %p140, %p141
      %p143 = scmp.ne.s32.totalorder %s134, %s135
      %p144 = scmp.eq.s32.totalorder %s19, 0
      %p145 = por %p143, %p144
      %p146 = scmp.ne.s32.totalorder %s134, %s135
      %p147 = scmp.eq.s32.totalorder %s20, 3
      %p148 = por %p146, %p147
      %p150 = scmp.ne.s32.totalorder %s135, %s149
      %p151 = scmp.eq.s32.totalorder %s20, 0
      %p152 = por %p150, %p151
      %s154 = sadd.s32 %s153, 1
      %p157 = scmp.eq.s32.totalorder %s14, 3
      %p158 = scmp.ne.s32.totalorder %s153, %s155
      %p159 = scmp.eq.s32.totalorder %s14, 0
      %p160 = por %p158, %p159
      %p161 = scmp.ne.s32.totalorder %s153, %s155
      %p162 = scmp.eq.s32.totalorder %s19, 3
      %p163 = por %p161, %p162
      %p164 = scmp.ne.s32.totalorder %s155, %s156
      %p165 = scmp.eq.s32.totalorder %s19, 0
      %p166 = por %p164, %p165
      %p167 = scmp.ne.s32.totalorder %s155, %s156
      %p168 = scmp.eq.s32.totalorder %s20, 3
      %p169 = por %p167, %p168
      %p171 = scmp.ne.s32.totalorder %s156, %s170
      %p172 = scmp.eq.s32.totalorder %s20, 0
      %p173 = por %p171, %p172
      %s174 = ssub.s32 %s14, %s21
      %p175 = scmp.eq.s32.totalorder %s174, 0
      %s177 = sadd.s32 %s176, 1
      %s178 = scalar_select %p175, %s176, %s177
      %p181 = pneg %p175
      %p182 = scmp.eq.s32.totalorder %s14, 3
      %p183 = por %p181, %p182
      %p184 = scmp.ne.s32.totalorder %s176, %s179
      %p185 = scmp.eq.s32.totalorder %s14, 0
      %p186 = por %p184, %p185
      %p187 = scmp.ne.s32.totalorder %s176, %s179
      %p188 = scmp.eq.s32.totalorder %s19, 3
      %p189 = por %p187, %p188
      %p190 = scmp.ne.s32.totalorder %s179, %s180
      %p191 = scmp.eq.s32.totalorder %s19, 0
      %p192 = por %p190, %p191
      %p193 = scmp.ne.s32.totalorder %s179, %s180
      %p194 = scmp.eq.s32.totalorder %s20, 3
      %p195 = por %p193, %p194
      %p197 = scmp.ne.s32.totalorder %s180, %s196
      %p198 = scmp.eq.s32.totalorder %s20, 0
      %p199 = por %p197, %p198
      %p200 = scmp.le.s32.totalorder 1, %s14
      %p201 = scmp.lt.s32.totalorder %s14, 5
      %p202 = pnand %p200, %p201
      %p203 = pneg %p202
      // Predicated region
      $region9: #{_simple_nn_forward_impl.1} parent=5 // pred_check
        _
      $region10: #{_simple_nn_forward_impl.1} parent=5 // pred_check_branch
        %205 = sbr.rel (%p202) target = $region12
      $region11: #{_simple_nn_forward_impl.1} parent=5 // pred_region
        %s206 = ssub.s32 %s14, 1
        // Predicated region
        $region13: #{_simple_nn_forward_impl.1} parent=11 // pred_check
          %p207 = pneg %p61
        $region14: #{_simple_nn_forward_impl.1} parent=11 // pred_check_branch
          %209 = sbr.rel (%p207) target = $region16
        $region15: #{_simple_nn_forward_impl.1} parent=11 // pred_region
          _
        $region16: #{_simple_nn_forward_impl.1} parent=11 // pred_fallthru
          _
        // Predicated region
        $region17: #{_simple_nn_forward_impl.1} parent=11 // pred_check
          %p210 = pneg %p82
        $region18: #{_simple_nn_forward_impl.1} parent=11 // pred_check_branch
          %212 = sbr.rel (%p210) target = $region20
        $region19: #{_simple_nn_forward_impl.1} parent=11 // pred_region
          _
        $region20: #{_simple_nn_forward_impl.1} parent=11 // pred_fallthru
          _
        // Predicated region
        $region21: #{_simple_nn_forward_impl.1} parent=11 // pred_check
          %p213 = pneg %p103
        $region22: #{_simple_nn_forward_impl.1} parent=11 // pred_check_branch
          %215 = sbr.rel (%p213) target = $region24
        $region23: #{_simple_nn_forward_impl.1} parent=11 // pred_region
          _
        $region24: #{_simple_nn_forward_impl.1} parent=11 // pred_fallthru
          _
        // Predicated region
        $region25: #{_simple_nn_forward_impl.1} parent=11 // pred_check
          %p216 = pneg %p124
        $region26: #{_simple_nn_forward_impl.1} parent=11 // pred_check_branch
          %218 = sbr.rel (%p216) target = $region28
        $region27: #{_simple_nn_forward_impl.1} parent=11 // pred_region
          _
        $region28: #{_simple_nn_forward_impl.1} parent=11 // pred_fallthru
          _
        // Predicated region
        $region29: #{_simple_nn_forward_impl.1} parent=11 // pred_check
          %p219 = pneg %p145
        $region30: #{_simple_nn_forward_impl.1} parent=11 // pred_check_branch
          %221 = sbr.rel (%p219) target = $region32
        $region31: #{_simple_nn_forward_impl.1} parent=11 // pred_region
          %s223 = ssub.s32 2048, 2048
          %224 = vsyncadd [#allocation3], %s223
          %s225 = sshll.u32 [#allocation2], 4
          %s226 = int_to_ptr.vmem [resolvable:$true] %s225
          %231 = dma.hbm_to_vmem [thread:$0]  %s5, 2048, %s226, [#allocation3], 128, 128, 8
        $region32: #{_simple_nn_forward_impl.1} parent=11 // pred_fallthru
          _
        // Predicated region
        $region33: #{_simple_nn_forward_impl.1} parent=11 // pred_check
          %p232 = pneg %p166
        $region34: #{_simple_nn_forward_impl.1} parent=11 // pred_check_branch
          %234 = sbr.rel (%p232) target = $region36
        $region35: #{_simple_nn_forward_impl.1} parent=11 // pred_region
          _
        $region36: #{_simple_nn_forward_impl.1} parent=11 // pred_fallthru
          _
      $region12: #{_simple_nn_forward_impl.1} parent=5 // pred_fallthru
        _
      %p235 = scmp.lt.s32.totalorder %s14, 4
      // Predicated region
      $region37: #{_simple_nn_forward_impl.1} parent=5 // pred_check
        %p236 = pneg %p235
      $region38: #{_simple_nn_forward_impl.1} parent=5 // pred_check_branch
        %238 = sbr.rel (%p236) target = $region40
      $region39: #{_simple_nn_forward_impl.1} parent=5 // pred_region
        // Predicated region
        $region41: #{_simple_nn_forward_impl.1} parent=39 // pred_check
          %p239 = pneg %p34
        $region42: #{_simple_nn_forward_impl.1} parent=39 // pred_check_branch
          %241 = sbr.rel (%p239) target = $region44
        $region43: #{_simple_nn_forward_impl.1} parent=39 // pred_region
          %s242 = smul.u32 4, %s14
          %p243 = scmp.lt.s32.totalorder %s242, 15
          %s244 = scalar_select %p243, %s242, 15
          %s245 = smul.addr %s244, 8
          %s246 = scalar_lea.vmem %s0, %s245
          %s247 = smul.u32 4, %s14
        $region44: #{_simple_nn_forward_impl.1} parent=39 // pred_fallthru
          _
      $region40: #{_simple_nn_forward_impl.1} parent=5 // pred_fallthru
        _
      %p248 = scmp.le.s32.totalorder 1, %s14
      %p249 = scmp.lt.s32.totalorder %s14, 5
      %p250 = pnand %p248, %p249
      %p251 = pneg %p250
      // Predicated region
      $region45: #{_simple_nn_forward_impl.1} parent=5 // pred_check
        _
      $region46: #{_simple_nn_forward_impl.1} parent=5 // pred_check_branch
        %253 = sbr.rel (%p250) target = $region48
      $region47: #{_simple_nn_forward_impl.1} parent=5 // pred_region
        %s254 = ssub.s32 %s14, 1
        // Predicated region
        $region49: #{_simple_nn_forward_impl.1} parent=47 // pred_check
          %p255 = pneg %p145
        $region50: #{_simple_nn_forward_impl.1} parent=47 // pred_check_branch
          %257 = sbr.rel (%p255) target = $region52
        $region51: #{_simple_nn_forward_impl.1} parent=47 // pred_region
          %258 = dma.done [#allocation3], 2048
        $region52: #{_simple_nn_forward_impl.1} parent=47 // pred_fallthru
          _
        %s259 = smul.u32 4, %s19
        %p260 = scmp.lt.s32.totalorder %s259, 15
        %s261 = scalar_select %p260, %s259, 15
        %s262 = smul.addr %s261, 8
        %s263 = scalar_lea.vmem %s0, %s262
        %p264 = pneg %p40
        %p265 = pneg %p37
        %p266 = pneg %p61
        %p267 = pneg %p58
        %p268 = pneg %p82
        %p269 = pneg %p79
        %p270 = pneg %p103
        %p271 = pneg %p100
        %p272 = pneg %p124
        %p273 = pneg %p121
        %p274 = pneg %p145
        %p275 = pneg %p142
        %p276 = pneg %p166
        %p277 = pneg %p163
        %p278 = pneg %p192
        %p279 = pneg %p189
        %s280 = smul.u32 4, %s19
        %p281 = scmp.lt.s32.totalorder %s280, 15
        %s282 = scalar_select %p281, %s280, 15
        %s283 = smul.addr %s282, 8
        %s284 = scalar_lea.vmem %s7, %s283
        %s285 = smul.u32 4, %s19
        %p286 = scmp.lt.s32.totalorder %s285, 15
        %s287 = scalar_select %p286, %s285, 15
        %s288 = smul.addr %s287, 8
        %s289 = scalar_lea.vmem %s0, %s288
        %s290 = smul.u32 4, %s19
        %s291 = smul.u32 4, %s19
        %p292 = scmp.lt.s32.totalorder %s291, 15
        %s293 = scalar_select %p292, %s291, 15
        %s294 = smul.addr %s293, 8
        %s295 = scalar_lea.vmem %s7, %s294
        %s296 = smul.u32 4, %s19
        %v297 = vld [vmem:[%s289] sm:$0xff]
        %v298 = vld [vmem:[%s289 + $0x8] sm:$0xff]
        %v299 = vld [vmem:[%s289 + $0x10] sm:$0xff]
        %v300 = vld [vmem:[%s289 + $0x18] sm:$0xff]
        %v301 = vld [vmem:[%s1] sm:$0xff]
        %v302 = vld [vmem:[%s1 + $0x8] sm:$0xff]
        %v303 = vld [vmem:[%s1 + $0x10] sm:$0xff]
        %v304 = vld [vmem:[%s1 + $0x18] sm:$0xff]
        %v305 = vld [vmem:[%s2] sm:$0x1]
        %v307 = vlaneseq
        %v308 = vshrl.u32 %v307, 7
        %v309 = vsub.s32 0, %v308
        %v310 = vrot.slane %v305, %v309
        %vm312 = vcmask 261120
        %v314 = vsel %vm312, %v297, 0
        %v317 = vsel %vm312, %v298, 0
        %v320 = vsel %vm312, %v299, 0
        %v323 = vsel %vm312, %v300, 0
        %325 = vmatprep.subr.mxu0 0.0
        %326 = vmatpush1.msra.mxu0 0.0
        %327 = vmatprep.subr.mxu0 0.0
        %328 = vmatpush1.msra.mxu0 0.0
        %329 = vmatprep.subr.mxu0 0.0
        %330 = vmatpush1.msra.mxu0 0.0
        %331 = vmatprep.subr.mxu0 0.0
        %332 = vmatpush1.msra.mxu0 0.0
        %333 = vmatprep.subr.mxu0 0.0
        %334 = vmatpush1.msra.mxu0 0.0
        %335 = vmatprep.subr.mxu0 0.0
        %336 = vmatpush1.msra.mxu0 0.0
        %337 = vmatprep.subr.mxu0 0.0
        %338 = vmatpush1.msra.mxu0 0.0
        %339 = vmatprep.subr.mxu0 0.0
        %340 = vmatpush1.msra.mxu0 0.0
        %341 = vmatprep.subr.mxu0 0.0
        %342 = vmatpush1.msra.mxu0 0.0
        %343 = vmatprep.subr.mxu0 0.0
        %344 = vmatpush1.msra.mxu0 0.0
        %345 = vmatprep.subr.mxu0 0.0
        %346 = vmatpush1.msra.mxu0 0.0
        %347 = vmatprep.subr.mxu0 0.0
        %348 = vmatpush1.msra.mxu0 0.0
        %349 = vmatprep.subr.mxu0 0.0
        %350 = vmatpush1.msra.mxu0 %v304
        %351 = vmatprep.subr.mxu0 0.0
        %352 = vmatpush1.msra.mxu0 %v303
        %353 = vmatprep.subr.mxu0 0.0
        %354 = vmatpush1.msra.mxu0 %v302
        %355 = vmatprep.subr.mxu0 0.0
        %356 = vmatpush1.msra.mxu0 %v301
        %357 = vmatprep.subr.mxu0 0.0
        %358 = vmatpush2.msra.mxu0 0.0
        %359 = vmatprep.subr.mxu0 0.0
        %360 = vmatpush2.msra.mxu0 0.0
        %361 = vmatprep.subr.mxu0 0.0
        %362 = vmatpush2.msra.mxu0 0.0
        %363 = vmatprep.subr.mxu0 0.0
        %364 = vmatpush2.msra.mxu0 0.0
        %365 = vmatprep.subr.mxu0 0.0
        %366 = vmatpush2.msra.mxu0 0.0
        %367 = vmatprep.subr.mxu0 0.0
        %368 = vmatpush2.msra.mxu0 0.0
        %369 = vmatprep.subr.mxu0 0.0
        %370 = vmatpush2.msra.mxu0 0.0
        %371 = vmatprep.subr.mxu0 0.0
        %372 = vmatpush2.msra.mxu0 0.0
        %373 = vmatprep.subr.mxu0 0.0
        %374 = vmatpush2.msra.mxu0 0.0
        %375 = vmatprep.subr.mxu0 0.0
        %376 = vmatpush2.msra.mxu0 0.0
        %377 = vmatprep.subr.mxu0 0.0
        %378 = vmatpush2.msra.mxu0 0.0
        %379 = vmatprep.subr.mxu0 0.0
        %380 = vmatpush2.msra.mxu0 0.0
        %381 = vmatprep.subr.mxu0 0.0
        %382 = vmatpush2.msra.mxu0 0.0
        %383 = vmatprep.subr.mxu0 0.0
        %384 = vmatpush2.msra.mxu0 0.0
        %385 = vmatprep.subr.mxu0 0.0
        %386 = vmatpush2.msra.mxu0 0.0
        %387 = vmatprep.subr.mxu0 0.0
        %388 = vmatpush2.msra.mxu0 0.0
        %389 = vmatprep.mubr.f32.mxu0 0.0
        %390 = vmatmul.mubr.f32.gmra.mxu0 %v314
        %v391 = vpop.f32.mrf.mxu0
        %v392 = vadd.f32 %v310, %v391
        %v393 = vpop.f32.mrf.mxu0
        %394 = vmatprep.mubr.f32.mxu0 0.0
        %395 = vmatmul.mubr.f32.gmra.mxu0 %v317
        %v396 = vpop.f32.mrf.mxu0
        %v397 = vadd.f32 %v310, %v396
        %v398 = vpop.f32.mrf.mxu0
        %399 = vmatprep.mubr.f32.mxu0 0.0
        %400 = vmatmul.mubr.f32.gmra.mxu0 %v320
        %v401 = vpop.f32.mrf.mxu0
        %v402 = vadd.f32 %v310, %v401
        %v403 = vpop.f32.mrf.mxu0
        %404 = vmatprep.mubr.f32.mxu0 0.0
        %405 = vmatmul.mubr.f32.gmra.mxu0 %v323
        %v406 = vpop.f32.mrf.mxu0
        %v407 = vadd.f32 %v310, %v406
        %v408 = vpop.f32.mrf.mxu0
        %409 = vdwg.mxu0
        %v410 = vmax.f32 %v392, 0.0
        %v411 = vmax.f32 %v397, 0.0
        %v412 = vmax.f32 %v402, 0.0
        %v413 = vmax.f32 %v407, 0.0
        %v414 = vld [vmem:[%s3] sm:$0xff]
        %v415 = vld [vmem:[%s3 + $0x8] sm:$0xff]
        %v416 = vld [vmem:[%s3 + $0x10] sm:$0xff]
        %v417 = vld [vmem:[%s3 + $0x18] sm:$0xff]
        %v418 = vld [vmem:[%s3 + $0x20] sm:$0xff]
        %v419 = vld [vmem:[%s3 + $0x28] sm:$0xff]
        %v420 = vld [vmem:[%s3 + $0x30] sm:$0xff]
        %v421 = vld [vmem:[%s3 + $0x38] sm:$0xff]
        %v422 = vld [vmem:[%s3 + $0x40] sm:$0xff]
        %v423 = vld [vmem:[%s3 + $0x48] sm:$0xff]
        %v424 = vld [vmem:[%s3 + $0x50] sm:$0xff]
        %v425 = vld [vmem:[%s3 + $0x58] sm:$0xff]
        %v426 = vld [vmem:[%s3 + $0x60] sm:$0xff]
        %v427 = vld [vmem:[%s3 + $0x68] sm:$0xff]
        %v428 = vld [vmem:[%s3 + $0x70] sm:$0xff]
        %v429 = vld [vmem:[%s3 + $0x78] sm:$0xff]
        %v430 = vld [vmem:[%s4] sm:$0x1]
        %v432 = vlaneseq
        %v433 = vshrl.u32 %v432, 7
        %v434 = vsub.s32 0, %v433
        %v435 = vrot.slane %v430, %v434
        %437 = vmatprep.subr.mxu0 0.0
        %438 = vmatpush1.msra.mxu0 %v429
        %439 = vmatprep.subr.mxu0 0.0
        %440 = vmatpush1.msra.mxu0 %v428
        %441 = vmatprep.subr.mxu0 0.0
        %442 = vmatpush1.msra.mxu0 %v427
        %443 = vmatprep.subr.mxu0 0.0
        %444 = vmatpush1.msra.mxu0 %v426
        %445 = vmatprep.subr.mxu0 0.0
        %446 = vmatpush1.msra.mxu0 %v425
        %447 = vmatprep.subr.mxu0 0.0
        %448 = vmatpush1.msra.mxu0 %v424
        %449 = vmatprep.subr.mxu0 0.0
        %450 = vmatpush1.msra.mxu0 %v423
        %451 = vmatprep.subr.mxu0 0.0
        %452 = vmatpush1.msra.mxu0 %v422
        %453 = vmatprep.subr.mxu0 0.0
        %454 = vmatpush1.msra.mxu0 %v421
        %455 = vmatprep.subr.mxu0 0.0
        %456 = vmatpush1.msra.mxu0 %v420
        %457 = vmatprep.subr.mxu0 0.0
        %458 = vmatpush1.msra.mxu0 %v419
        %459 = vmatprep.subr.mxu0 0.0
        %460 = vmatpush1.msra.mxu0 %v418
        %461 = vmatprep.subr.mxu0 0.0
        %462 = vmatpush1.msra.mxu0 %v417
        %463 = vmatprep.subr.mxu0 0.0
        %464 = vmatpush1.msra.mxu0 %v416
        %465 = vmatprep.subr.mxu0 0.0
        %466 = vmatpush1.msra.mxu0 %v415
        %467 = vmatprep.subr.mxu0 0.0
        %468 = vmatpush1.msra.mxu0 %v414
        %469 = vmatprep.subr.mxu0 0.0
        %470 = vmatpush2.msra.mxu0 0.0
        %471 = vmatprep.subr.mxu0 0.0
        %472 = vmatpush2.msra.mxu0 0.0
        %473 = vmatprep.subr.mxu0 0.0
        %474 = vmatpush2.msra.mxu0 0.0
        %475 = vmatprep.subr.mxu0 0.0
        %476 = vmatpush2.msra.mxu0 0.0
        %477 = vmatprep.subr.mxu0 0.0
        %478 = vmatpush2.msra.mxu0 0.0
        %479 = vmatprep.subr.mxu0 0.0
        %480 = vmatpush2.msra.mxu0 0.0
        %481 = vmatprep.subr.mxu0 0.0
        %482 = vmatpush2.msra.mxu0 0.0
        %483 = vmatprep.subr.mxu0 0.0
        %484 = vmatpush2.msra.mxu0 0.0
        %485 = vmatprep.subr.mxu0 0.0
        %486 = vmatpush2.msra.mxu0 0.0
        %487 = vmatprep.subr.mxu0 0.0
        %488 = vmatpush2.msra.mxu0 0.0
        %489 = vmatprep.subr.mxu0 0.0
        %490 = vmatpush2.msra.mxu0 0.0
        %491 = vmatprep.subr.mxu0 0.0
        %492 = vmatpush2.msra.mxu0 0.0
        %493 = vmatprep.subr.mxu0 0.0
        %494 = vmatpush2.msra.mxu0 0.0
        %495 = vmatprep.subr.mxu0 0.0
        %496 = vmatpush2.msra.mxu0 0.0
        %497 = vmatprep.subr.mxu0 0.0
        %498 = vmatpush2.msra.mxu0 0.0
        %499 = vmatprep.subr.mxu0 0.0
        %500 = vmatpush2.msra.mxu0 0.0
        %501 = vmatprep.mubr.f32.mxu0 0.0
        %502 = vmatmul.mubr.f32.gmra.mxu0 %v410
        %v503 = vpop.f32.mrf.mxu0
        %v504 = vadd.f32 %v435, %v503
        %v505 = vpop.f32.mrf.mxu0
        %506 = vmatprep.mubr.f32.mxu0 0.0
        %507 = vmatmul.mubr.f32.gmra.mxu0 %v411
        %v508 = vpop.f32.mrf.mxu0
        %v509 = vadd.f32 %v435, %v508
        %v510 = vpop.f32.mrf.mxu0
        %511 = vmatprep.mubr.f32.mxu0 0.0
        %512 = vmatmul.mubr.f32.gmra.mxu0 %v412
        %v513 = vpop.f32.mrf.mxu0
        %v514 = vadd.f32 %v435, %v513
        %v515 = vpop.f32.mrf.mxu0
        %516 = vmatprep.mubr.f32.mxu0 0.0
        %517 = vmatmul.mubr.f32.gmra.mxu0 %v413
        %v518 = vpop.f32.mrf.mxu0
        %v519 = vadd.f32 %v435, %v518
        %v520 = vpop.f32.mrf.mxu0
        %521 = vdwg.mxu0
        %v522 = vmax.f32 %v504, 0.0
        %v523 = vmax.f32 %v509, 0.0
        %v524 = vmax.f32 %v514, 0.0
        %v525 = vmax.f32 %v519, 0.0
        %v526 = vld [vmem:[#allocation2] sm:$0xff]
        %v527 = vld [vmem:[#allocation2 + $0x8] sm:$0xff]
        %v528 = vld [vmem:[#allocation2 + $0x10] sm:$0xff]
        %v529 = vld [vmem:[#allocation2 + $0x18] sm:$0xff]
        %v530 = vld [vmem:[#allocation2 + $0x20] sm:$0xff]
        %v531 = vld [vmem:[#allocation2 + $0x28] sm:$0xff]
        %v532 = vld [vmem:[#allocation2 + $0x30] sm:$0xff]
        %v533 = vld [vmem:[#allocation2 + $0x38] sm:$0xff]
        %v534 = vld [vmem:[#allocation2 + $0x40] sm:$0xff]
        %v535 = vld [vmem:[#allocation2 + $0x48] sm:$0xff]
        %v536 = vld [vmem:[#allocation2 + $0x50] sm:$0xff]
        %v537 = vld [vmem:[#allocation2 + $0x58] sm:$0xff]
        %v538 = vld [vmem:[#allocation2 + $0x60] sm:$0xff]
        %v539 = vld [vmem:[#allocation2 + $0x68] sm:$0xff]
        %v540 = vld [vmem:[#allocation2 + $0x70] sm:$0xff]
        %v541 = vld [vmem:[#allocation2 + $0x78] sm:$0xff]
        %v542 = vld [vmem:[%s6] sm:$0x1]
        %v544 = vlaneseq
        %v545 = vshrl.u32 %v544, 7
        %v546 = vsub.s32 0, %v545
        %v547 = vrot.slane %v542, %v546
        %549 = vmatprep.subr.mxu0 0.0
        %550 = vmatpush1.msra.mxu0 %v541
        %551 = vmatprep.subr.mxu0 0.0
        %552 = vmatpush1.msra.mxu0 %v540
        %553 = vmatprep.subr.mxu0 0.0
        %554 = vmatpush1.msra.mxu0 %v539
        %555 = vmatprep.subr.mxu0 0.0
        %556 = vmatpush1.msra.mxu0 %v538
        %557 = vmatprep.subr.mxu0 0.0
        %558 = vmatpush1.msra.mxu0 %v537
        %559 = vmatprep.subr.mxu0 0.0
        %560 = vmatpush1.msra.mxu0 %v536
        %561 = vmatprep.subr.mxu0 0.0
        %562 = vmatpush1.msra.mxu0 %v535
        %563 = vmatprep.subr.mxu0 0.0
        %564 = vmatpush1.msra.mxu0 %v534
        %565 = vmatprep.subr.mxu0 0.0
        %566 = vmatpush1.msra.mxu0 %v533
        %567 = vmatprep.subr.mxu0 0.0
        %568 = vmatpush1.msra.mxu0 %v532
        %569 = vmatprep.subr.mxu0 0.0
        %570 = vmatpush1.msra.mxu0 %v531
        %571 = vmatprep.subr.mxu0 0.0
        %572 = vmatpush1.msra.mxu0 %v530
        %573 = vmatprep.subr.mxu0 0.0
        %574 = vmatpush1.msra.mxu0 %v529
        %575 = vmatprep.subr.mxu0 0.0
        %576 = vmatpush1.msra.mxu0 %v528
        %577 = vmatprep.subr.mxu0 0.0
        %578 = vmatpush1.msra.mxu0 %v527
        %579 = vmatprep.subr.mxu0 0.0
        %580 = vmatpush1.msra.mxu0 %v526
        %581 = vmatprep.subr.mxu0 0.0
        %582 = vmatpush2.msra.mxu0 0.0
        %583 = vmatprep.subr.mxu0 0.0
        %584 = vmatpush2.msra.mxu0 0.0
        %585 = vmatprep.subr.mxu0 0.0
        %586 = vmatpush2.msra.mxu0 0.0
        %587 = vmatprep.subr.mxu0 0.0
        %588 = vmatpush2.msra.mxu0 0.0
        %589 = vmatprep.subr.mxu0 0.0
        %590 = vmatpush2.msra.mxu0 0.0
        %591 = vmatprep.subr.mxu0 0.0
        %592 = vmatpush2.msra.mxu0 0.0
        %593 = vmatprep.subr.mxu0 0.0
        %594 = vmatpush2.msra.mxu0 0.0
        %595 = vmatprep.subr.mxu0 0.0
        %596 = vmatpush2.msra.mxu0 0.0
        %597 = vmatprep.subr.mxu0 0.0
        %598 = vmatpush2.msra.mxu0 0.0
        %599 = vmatprep.subr.mxu0 0.0
        %600 = vmatpush2.msra.mxu0 0.0
        %601 = vmatprep.subr.mxu0 0.0
        %602 = vmatpush2.msra.mxu0 0.0
        %603 = vmatprep.subr.mxu0 0.0
        %604 = vmatpush2.msra.mxu0 0.0
        %605 = vmatprep.subr.mxu0 0.0
        %606 = vmatpush2.msra.mxu0 0.0
        %607 = vmatprep.subr.mxu0 0.0
        %608 = vmatpush2.msra.mxu0 0.0
        %609 = vmatprep.subr.mxu0 0.0
        %610 = vmatpush2.msra.mxu0 0.0
        %611 = vmatprep.subr.mxu0 0.0
        %612 = vmatpush2.msra.mxu0 0.0
        %613 = vmatprep.mubr.f32.mxu0 0.0
        %614 = vmatmul.mubr.f32.gmra.mxu0 %v522
        %v615 = vpop.f32.mrf.mxu0
        %v616 = vadd.f32 %v547, %v615
        %v617 = vpop.f32.mrf.mxu0
        %618 = vmatprep.mubr.f32.mxu0 0.0
        %619 = vmatmul.mubr.f32.gmra.mxu0 %v523
        %v620 = vpop.f32.mrf.mxu0
        %v621 = vadd.f32 %v547, %v620
        %v622 = vpop.f32.mrf.mxu0
        %623 = vmatprep.mubr.f32.mxu0 0.0
        %624 = vmatmul.mubr.f32.gmra.mxu0 %v524
        %v625 = vpop.f32.mrf.mxu0
        %v626 = vadd.f32 %v547, %v625
        %v627 = vpop.f32.mrf.mxu0
        %628 = vmatprep.mubr.f32.mxu0 0.0
        %629 = vmatmul.mubr.f32.gmra.mxu0 %v525
        %v630 = vpop.f32.mrf.mxu0
        %v631 = vadd.f32 %v547, %v630
        %v632 = vpop.f32.mrf.mxu0
        %633 = vdwg.mxu0
        %634 = vst [vmem:[%s295] sm:$0xff] %v616
        %635 = vst [vmem:[%s295 + $0x8] sm:$0xff] %v621
        %636 = vst [vmem:[%s295 + $0x10] sm:$0xff] %v626
        %637 = vst [vmem:[%s295 + $0x18] sm:$0xff] %v631
        %s638 = smul.u32 4, %s19
        %p639 = scmp.lt.s32.totalorder %s638, 15
        %s640 = scalar_select %p639, %s638, 15
        %s641 = smul.addr %s640, 8
        %s642 = scalar_lea.vmem %s7, %s641
        // Predicated region
        $region53: #{_simple_nn_forward_impl.1} parent=47 // pred_check
          %p643 = pneg %p189
        $region54: #{_simple_nn_forward_impl.1} parent=47 // pred_check_branch
          %645 = sbr.rel (%p643) target = $region56
        $region55: #{_simple_nn_forward_impl.1} parent=47 // pred_region
          %s646 = smul.u32 4, %s19
        $region56: #{_simple_nn_forward_impl.1} parent=47 // pred_fallthru
          _
      $region48: #{_simple_nn_forward_impl.1} parent=5 // pred_fallthru
        _
      %p647 = scmp.le.s32.totalorder 2, %s14
      // Predicated region
      $region57: #{_simple_nn_forward_impl.1} parent=5 // pred_check
        %p648 = pneg %p647
      $region58: #{_simple_nn_forward_impl.1} parent=5 // pred_check_branch
        %650 = sbr.rel (%p648) target = $region60
      $region59: #{_simple_nn_forward_impl.1} parent=5 // pred_region
        %s651 = ssub.s32 %s14, 2
        // Predicated region
        $region61: #{_simple_nn_forward_impl.1} parent=59 // pred_check
          %p652 = pneg %p195
        $region62: #{_simple_nn_forward_impl.1} parent=59 // pred_check_branch
          %654 = sbr.rel (%p652) target = $region64
        $region63: #{_simple_nn_forward_impl.1} parent=59 // pred_region
          %s655 = smul.u32 4, %s20
          %p656 = scmp.lt.s32.totalorder %s655, 15
          %s657 = scalar_select %p656, %s655, 15
          %s658 = smul.addr %s657, 8
          %s659 = scalar_lea.vmem %s7, %s658
        $region64: #{_simple_nn_forward_impl.1} parent=59 // pred_fallthru
          _
      $region60: #{_simple_nn_forward_impl.1} parent=5 // pred_fallthru
        _
    $region6: #{_simple_nn_forward_impl.1} parent=1 // loop_footer
      %s18 = sadd.s32 1, %s14
    $region7: #{_simple_nn_forward_impl.1} parent=1 // loop_footer_branch
      %13 = sbr.rel target = $region3
    $region8: #{_simple_nn_forward_impl.1} parent=1 // loop_exit
      _
    %660 = vsyncpa [#allocation3], 1
    %s661 = scalar_lea.sflag [#allocation3], 1
    %662 = vsyncpa %s661, 1

</llo_original>
